<compile_context>
chip_gen: v6e
topology: v6e:2x2x1
jax: 0.10.0
libtpu: 0.0.40
codegen_flags: <defaults>
</compile_context>

<pallas_src>
import functools

import numpy as np
import jax
import jax.numpy as jnp
from jax import lax
from jax.experimental import pallas as pl
from jax.experimental.pallas import tpu as pltpu


def _sigmoid(z):
    # f32 in-kernel; exp runs on the EUP and saturates correctly for large |z|.
    return 1.0 / (1.0 + jnp.exp(-z))


def _cbam_kernel(x_ref, w1t_ref, w2t_ref, wt_ref, mask_ref, bias_ref, o_ref,
                 *, shifts):
    """One grid step = B_blk images.

    x_ref    : (B, C, HW)  VMEM  input feature maps (lane-dense, HW % 128 == 0)
    w1t_ref  : (C, C//4)   VMEM  shared-MLP layer 1, pre-transposed
    w2t_ref  : (C//4, C)   VMEM  shared-MLP layer 2, pre-transposed
    wt_ref   : (T, C)      VMEM  per-tap channel weights, pre-scaled by m1/m2/m3
    mask_ref : (T, HW)     VMEM  pre-shifted 0/1 border-validity masks
    bias_ref : (1,)        SMEM  folded scalar bias  m1*b1 + m2*b2 + m3*b3 + b_mix
    o_ref    : (B, C, HW)  VMEM  output
    """
    b = x_ref.shape[0]
    hw = x_ref.shape[2]
    x3d = x_ref[...]                                          # (B, C, HW) f32

    # ---------------- channel attention (MXU) ----------------
    avg = jnp.mean(x3d, axis=2)                               # (B, C)
    mx = jnp.max(x3d, axis=2)                                 # (B, C)
    pooled = jnp.concatenate([avg, mx], axis=0)               # (2B, C)
    hid = jnp.maximum(
        jnp.dot(pooled, w1t_ref[...], preferred_element_type=jnp.float32), 0.0)
    att = jnp.dot(hid, w2t_ref[...], preferred_element_type=jnp.float32)  # (2B, C)
    ca = _sigmoid(att[:b] + att[b:])                          # (B, C)

    # ---------------- spatial attention ----------------
    # Fold ca into the tap matrix instead of forming x1 = ca * x.
    wt_ca = wt_ref[...][None, :, :] * ca[:, None, :]          # (B, T, C)
    y = jnp.einsum("btc,bcp->btp", wt_ca, x3d,
                   preferred_element_type=jnp.float32)        # (B, T, HW)
    y = y * mask_ref[...][None, :, :]                         # one dense mask pass

    rows = []
    for t, s in enumerate(shifts):
        row = y[:, t, :]                                      # (B, HW)
        sh = (-s) % hw
        if sh:
            row = pltpu.roll(row, sh, 1)                      # row[p] <- y[.., p+s]
        rows.append(row)
    # Pairwise tree keeps the add-dependence chain ~log2(T) deep.
    while len(rows) > 1:
        nxt = [rows[i] + rows[i + 1] for i in range(0, len(rows) - 1, 2)]
        if len(rows) % 2:
            nxt.append(rows[-1])
        rows = nxt
    sa = _sigmoid(rows[0] + bias_ref[0])                      # (B, HW)

    # Fused output pass: out = x * ca * sa   (== sa * (ca * x))
    o_ref[...] = x3d * ca[:, :, None] * sa[:, None, :]


def _pick_block_batch(n, c, hw):
    """Largest divisor of n such that (a) >=2 grid steps remain when n >= 2
    (keeps both v7x TensorCores busy via the "parallel" axis) and (b) the
    double-buffered f32 in+out blocks stay under ~8 MiB (safe for the 32 MiB
    scoped-VMEM default on all generations, including v7x's 64 MiB VMEM)."""
    per_img_bytes = 2 * 2 * c * hw * 4        # in + out, double-buffered, f32
    best = 1
    for b in range(1, n + 1):
        if n % b:
            continue
        if n >= 2 and n // b < 2:
            continue
        if b * per_img_bytes > (8 << 20):
            continue
        best = b
    return best


@jax.jit
def cbam(x, w_mlp1, w_mlp2, w_c1, b_c1, w_c2, b_c2, w_c3, b_c3, w_mix, b_mix):
    """x: (N, C, H, W) f32.  Weights follow the PyTorch parameter shapes:
       w_mlp1 (C//4, C), w_mlp2 (C, C//4)      shared MLP (1x1 convs, no bias)
       w_c1 (1, C, 1, 1), b_c1 ()              conv1
       w_c2 (1, C, 3, 3), b_c2 ()              conv2 (pad 1)
       w_c3 (1, C, 5, 5), b_c3 ()              conv3 (pad 2)
       w_mix (1, 3, 1, 1), b_mix ()            final 3->1 1x1 conv
    """
    n, c, h, w = x.shape
    hw = h * w
    assert hw % 128 == 0, "H*W must be a multiple of 128 for the lane-dense layout"

    # --- taps: (dh, dw) offsets of the 1x1, 3x3 (pad 1) and 5x5 (pad 2) convs ---
    taps = [(0, 0)]
    taps += [(i - 1, j - 1) for i in range(3) for j in range(3)]
    taps += [(i - 2, j - 2) for i in range(5) for j in range(5)]
    shifts = tuple(dh * w + dw for dh, dw in taps)
    n_taps = len(taps)

    # --- (T, C) tap channel weights, pre-scaled by the 3->1 mix weights -------
    rows = [w_c1[0, :, 0, 0][None, :]]
    rows += [w_c2[0, :, i, j][None, :] for i in range(3) for j in range(3)]
    rows += [w_c3[0, :, i, j][None, :] for i in range(5) for j in range(5)]
    w_taps = jnp.concatenate(rows, axis=0).astype(jnp.float32)        # (35, C)
    m1 = w_mix[0, 0, 0, 0]
    m2 = w_mix[0, 1, 0, 0]
    m3 = w_mix[0, 2, 0, 0]
    row_scale = jnp.concatenate([jnp.broadcast_to(m1, (1,)),
                                 jnp.broadcast_to(m2, (9,)),
                                 jnp.broadcast_to(m3, (25,))]).astype(jnp.float32)
    w_taps = w_taps * row_scale[:, None]
    bias = (m1 * b_c1 + m2 * b_c2 + m3 * b_c3 + b_mix).astype(jnp.float32)[None]

    # --- pre-shifted border-validity masks (static shapes -> numpy constants) --
    hh, ww = np.meshgrid(np.arange(h), np.arange(w), indexing="ij")
    hh = hh.reshape(-1)
    ww = ww.reshape(-1)
    mask_rows = []
    for (dh, dw), s in zip(taps, shifts):
        valid = ((hh + dh >= 0) & (hh + dh < h) &
                 (ww + dw >= 0) & (ww + dw < w)).astype(np.float32)
        mask_rows.append(np.roll(valid, s))       # mask'[q] = valid[(q - s) % HW]
    masks = jnp.asarray(np.stack(mask_rows, axis=0))                  # (35, HW)

    # Pre-transposed MLP weights so the kernel needs no in-kernel transposes.
    w1t = jnp.transpose(w_mlp1).astype(jnp.float32)                   # (C, C//4)
    w2t = jnp.transpose(w_mlp2).astype(jnp.float32)                   # (C//4, C)

    x_flat = x.reshape(n, c, hw).astype(jnp.float32)
    b_blk = _pick_block_batch(n, c, hw)
    grid = (n // b_blk,)

    kernel = functools.partial(_cbam_kernel, shifts=shifts)
    out_flat = pl.pallas_call(
        kernel,
        out_shape=jax.ShapeDtypeStruct((n, c, hw), jnp.float32),
        grid=grid,
        in_specs=[
            pl.BlockSpec((b_blk, c, hw), lambda i: (i, 0, 0)),   # x block
            pl.BlockSpec((c, c // 4), lambda i: (0, 0)),         # MLP w1^T
            pl.BlockSpec((c // 4, c), lambda i: (0, 0)),         # MLP w2^T
            pl.BlockSpec((n_taps, c), lambda i: (0, 0)),         # folded tap weights
            pl.BlockSpec((n_taps, hw), lambda i: (0, 0)),        # pre-shifted masks
            pl.BlockSpec(memory_space=pltpu.SMEM),               # folded scalar bias
        ],
        out_specs=pl.BlockSpec((b_blk, c, hw), lambda i: (i, 0, 0)),
        compiler_params=pltpu.CompilerParams(
            dimension_semantics=("parallel",)),
    )(x_flat, w1t, w2t, w_taps, masks, bias)
    return out_flat.reshape(n, c, h, w)


def _reference(x, w_mlp1, w_mlp2, w_c1, b_c1, w_c2, b_c2, w_c3, b_c3, w_mix, b_mix):
    hi = jax.lax.Precision.HIGHEST
    avg = jnp.mean(x, axis=(2, 3))
    mx = jnp.max(x, axis=(2, 3))

    def mlp(v):
        hid = jax.nn.relu(jnp.einsum("oc,nc->no", w_mlp1, v, precision=hi))
        return jnp.einsum("oc,nc->no", w_mlp2, hid, precision=hi)

    ca = jax.nn.sigmoid(mlp(avg) + mlp(mx))
    x1 = ca[:, :, None, None] * x

    def conv(inp, ker, pad):
        return lax.conv_general_dilated(
            inp, ker, window_strides=(1, 1), padding=[(pad, pad), (pad, pad)],
            dimension_numbers=("NCHW", "OIHW", "NCHW"), precision=hi)

    o1 = conv(x1, w_c1, 0) + b_c1
    o2 = conv(x1, w_c2, 1) + b_c2
    o3 = conv(x1, w_c3, 2) + b_c3
    cat = jnp.concatenate([o1, o2, o3], axis=1)
    sa = jax.nn.sigmoid(conv(cat, w_mix, 0) + b_mix)
    return sa * x1


if __name__ == "__main__":
    key = jax.random.PRNGKey(0)
    ks = jax.random.split(key, 11)

    # C must be 128: Multiscale_SpatialAttentionModule hard-codes 128 in-channels.
    N, C, H, W = 2, 128, 16, 16
    x = jax.random.normal(ks[0], (N, C, H, W), dtype=jnp.float32)

    w_mlp1 = jax.random.normal(ks[1], (C // 4, C), jnp.float32) * (1.0 / jnp.sqrt(C))
    w_mlp2 = jax.random.normal(ks[2], (C, C // 4), jnp.float32) * (1.0 / jnp.sqrt(C // 4))
    w_c1 = jax.random.normal(ks[3], (1, C, 1, 1), jnp.float32) * 0.09
    b_c1 = jax.random.normal(ks[4], (), jnp.float32) * 0.1
    w_c2 = jax.random.normal(ks[5], (1, C, 3, 3), jnp.float32) * 0.03
    b_c2 = jax.random.normal(ks[6], (), jnp.float32) * 0.1
    w_c3 = jax.random.normal(ks[7], (1, C, 5, 5), jnp.float32) * 0.018
    b_c3 = jax.random.normal(ks[8], (), jnp.float32) * 0.1
    w_mix = jax.random.normal(ks[9], (1, 3, 1, 1), jnp.float32) * 0.5
    b_mix = jax.random.normal(ks[10], (), jnp.float32) * 0.1

    args = (x, w_mlp1, w_mlp2, w_c1, b_c1, w_c2, b_c2, w_c3, b_c3, w_mix, b_mix)

    out = jax.block_until_ready(cbam(*args))
    ref = _reference(*args)

    assert out.shape == (N, C, H, W), out.shape
    max_err = float(jnp.max(jnp.abs(out - ref)))
    assert jnp.allclose(out, ref, rtol=1e-3, atol=1e-3), max_err
    print("KERNEL_OK")
</pallas_src>

<mosaic_0001>
module attributes {stable_mosaic.version = 11 : i64} {
  func.func @_cbam_kernel(%arg0: i32, %arg1: memref<1x128x256xf32, #tpu.memory_space<vmem>>, %arg2: memref<128x32xf32, #tpu.memory_space<vmem>>, %arg3: memref<32x128xf32, #tpu.memory_space<vmem>>, %arg4: memref<35x128xf32, #tpu.memory_space<vmem>>, %arg5: memref<35x256xf32, #tpu.memory_space<vmem>>, %arg6: memref<1xf32, #tpu.memory_space<smem>>, %arg7: memref<1x128x256xf32, #tpu.memory_space<vmem>>) attributes {dimension_semantics = [#tpu.dimension_semantics<parallel>], iteration_bounds = array<i64: 2>, scalar_prefetch = 0 : i64, scratch_operands = 0 : i64, tpu.core_type = #tpu.core_type<tc>, window_params = [{transform_indices = @transform_0, window_bounds = array<i64: 1, 128, 256>}, {pipeline_mode = #tpu.pipeline_mode<synchronous>, transform_indices = @transform_1, window_bounds = array<i64: 128, 32>}, {pipeline_mode = #tpu.pipeline_mode<synchronous>, transform_indices = @transform_2, window_bounds = array<i64: 32, 128>}, {pipeline_mode = #tpu.pipeline_mode<synchronous>, transform_indices = @transform_3, window_bounds = array<i64: 35, 128>}, {pipeline_mode = #tpu.pipeline_mode<synchronous>, transform_indices = @transform_4, window_bounds = array<i64: 35, 256>}, {transform_indices = @transform_5, window_bounds = array<i64: 1>}, {transform_indices = @transform_6, window_bounds = array<i64: 1, 128, 256>}]} {
    %c0 = arith.constant 0 : index
    %c0_0 = arith.constant 0 : index
    %c0_1 = arith.constant 0 : index
    %0 = vector.load %arg1[%c0, %c0_0, %c0_1] : memref<1x128x256xf32, #tpu.memory_space<vmem>>, vector<1x128x256xf32>
    %cst = arith.constant dense<0.000000e+00> : vector<1x128xf32>
    %1 = vector.multi_reduction <add>, %0, %cst [2] : vector<1x128x256xf32> to vector<1x128xf32>
    %cst_2 = arith.constant 2.560000e+02 : f32
    %2 = vector.broadcast %cst_2 : f32 to vector<1x128xf32>
    %3 = arith.divf %1, %2 : vector<1x128xf32>
    %cst_3 = arith.constant dense<0xFF800000> : vector<1x128xf32>
    %4 = vector.multi_reduction <maximumf>, %0, %cst_3 [2] : vector<1x128x256xf32> to vector<1x128xf32>
    %5 = tpu.concatenate %3, %4 in 0 : vector<1x128xf32>, vector<1x128xf32> -> vector<2x128xf32>
    %c0_4 = arith.constant 0 : index
    %c0_5 = arith.constant 0 : index
    %6 = vector.load %arg2[%c0_4, %c0_5] : memref<128x32xf32, #tpu.memory_space<vmem>>, vector<128x32xf32>
    %cst_6 = arith.constant dense<0.000000e+00> : vector<2x32xf32>
    %7 = tpu.matmul %5, %6, %cst_6 {dimension_numbers = #tpu.dot_dimension_numbers<[1], [0], [0], [1], [0, 0, 1, 1], [], []>} : vector<2x128xf32>, vector<128x32xf32>, vector<2x32xf32> -> vector<2x32xf32>
    %cst_7 = arith.constant 0.000000e+00 : f32
    %8 = vector.broadcast %cst_7 : f32 to vector<2x32xf32>
    %9 = arith.maximumf %7, %8 : vector<2x32xf32>
    %c0_8 = arith.constant 0 : index
    %c0_9 = arith.constant 0 : index
    %10 = vector.load %arg3[%c0_8, %c0_9] : memref<32x128xf32, #tpu.memory_space<vmem>>, vector<32x128xf32>
    %cst_10 = arith.constant dense<0.000000e+00> : vector<2x128xf32>
    %11 = tpu.matmul %9, %10, %cst_10 {dimension_numbers = #tpu.dot_dimension_numbers<[1], [0], [0], [1], [0, 0, 1, 1], [], []>} : vector<2x32xf32>, vector<32x128xf32>, vector<2x128xf32> -> vector<2x128xf32>
    %12 = vector.extract_strided_slice %11 {offsets = [0, 0], sizes = [1, 128], strides = [1, 1]} : vector<2x128xf32> to vector<1x128xf32>
    %13 = vector.extract_strided_slice %11 {offsets = [1, 0], sizes = [1, 128], strides = [1, 1]} : vector<2x128xf32> to vector<1x128xf32>
    %14 = arith.addf %12, %13 : vector<1x128xf32>
    %cst_11 = arith.constant 0.000000e+00 : f32
    %15 = vector.broadcast %cst_11 : f32 to vector<1x128xf32>
    %16 = arith.subf %15, %14 : vector<1x128xf32>
    %17 = math.exp %16 : vector<1x128xf32>
    %cst_12 = arith.constant 1.000000e+00 : f32
    %18 = vector.broadcast %cst_12 : f32 to vector<1x128xf32>
    %19 = arith.addf %18, %17 : vector<1x128xf32>
    %cst_13 = arith.constant 1.000000e+00 : f32
    %20 = vector.broadcast %cst_13 : f32 to vector<1x128xf32>
    %21 = arith.divf %20, %19 : vector<1x128xf32>
    %c0_14 = arith.constant 0 : index
    %c0_15 = arith.constant 0 : index
    %22 = vector.load %arg4[%c0_14, %c0_15] : memref<35x128xf32, #tpu.memory_space<vmem>>, vector<35x128xf32>
    %23 = vector.shape_cast %22 : vector<35x128xf32> to vector<1x35x128xf32>
    %24 = vector.shape_cast %21 : vector<1x128xf32> to vector<1x1x128xf32>
    %25 = vector.broadcast %24 : vector<1x1x128xf32> to vector<1x35x128xf32>
    %26 = arith.mulf %23, %25 : vector<1x35x128xf32>
    "tpu.trace_start"() <{level = 10 : i32, message = "btc,bcp->btp"}> : () -> ()
    %cst_16 = arith.constant dense<0.000000e+00> : vector<1x35x256xf32>
    %27 = tpu.matmul %26, %0, %cst_16 {dimension_numbers = #tpu.dot_dimension_numbers<[2], [1], [1], [2], [0, 0, 0, 1, 1, 2], [0], [0]>} : vector<1x35x128xf32>, vector<1x128x256xf32>, vector<1x35x256xf32> -> vector<1x35x256xf32>
    "tpu.trace_stop"() : () -> ()
    %c0_17 = arith.constant 0 : index
    %c0_18 = arith.constant 0 : index
    %28 = vector.load %arg5[%c0_17, %c0_18] : memref<35x256xf32, #tpu.memory_space<vmem>>, vector<35x256xf32>
    %29 = vector.shape_cast %28 : vector<35x256xf32> to vector<1x35x256xf32>
    %30 = arith.mulf %27, %29 : vector<1x35x256xf32>
    %31 = vector.extract_strided_slice %30 {offsets = [0, 0, 0], sizes = [1, 1, 256], strides = [1, 1, 1]} : vector<1x35x256xf32> to vector<1x1x256xf32>
    %32 = vector.shape_cast %31 : vector<1x1x256xf32> to vector<1x256xf32>
    %33 = vector.extract_strided_slice %30 {offsets = [0, 1, 0], sizes = [1, 1, 256], strides = [1, 1, 1]} : vector<1x35x256xf32> to vector<1x1x256xf32>
    %34 = vector.shape_cast %33 : vector<1x1x256xf32> to vector<1x256xf32>
    %c17_i32 = arith.constant 17 : i32
    %35 = tpu.dynamic_rotate %34 by %c17_i32 dim 1 : vector<1x256xf32>, i32 -> vector<1x256xf32>
    %36 = vector.extract_strided_slice %30 {offsets = [0, 2, 0], sizes = [1, 1, 256], strides = [1, 1, 1]} : vector<1x35x256xf32> to vector<1x1x256xf32>
    %37 = vector.shape_cast %36 : vector<1x1x256xf32> to vector<1x256xf32>
    %c16_i32 = arith.constant 16 : i32
    %38 = tpu.dynamic_rotate %37 by %c16_i32 dim 1 : vector<1x256xf32>, i32 -> vector<1x256xf32>
    %39 = vector.extract_strided_slice %30 {offsets = [0, 3, 0], sizes = [1, 1, 256], strides = [1, 1, 1]} : vector<1x35x256xf32> to vector<1x1x256xf32>
    %40 = vector.shape_cast %39 : vector<1x1x256xf32> to vector<1x256xf32>
    %c15_i32 = arith.constant 15 : i32
    %41 = tpu.dynamic_rotate %40 by %c15_i32 dim 1 : vector<1x256xf32>, i32 -> vector<1x256xf32>
    %42 = vector.extract_strided_slice %30 {offsets = [0, 4, 0], sizes = [1, 1, 256], strides = [1, 1, 1]} : vector<1x35x256xf32> to vector<1x1x256xf32>
    %43 = vector.shape_cast %42 : vector<1x1x256xf32> to vector<1x256xf32>
    %c1_i32 = arith.constant 1 : i32
    %44 = tpu.dynamic_rotate %43 by %c1_i32 dim 1 : vector<1x256xf32>, i32 -> vector<1x256xf32>
    %45 = vector.extract_strided_slice %30 {offsets = [0, 5, 0], sizes = [1, 1, 256], strides = [1, 1, 1]} : vector<1x35x256xf32> to vector<1x1x256xf32>
    %46 = vector.shape_cast %45 : vector<1x1x256xf32> to vector<1x256xf32>
    %47 = vector.extract_strided_slice %30 {offsets = [0, 6, 0], sizes = [1, 1, 256], strides = [1, 1, 1]} : vector<1x35x256xf32> to vector<1x1x256xf32>
    %48 = vector.shape_cast %47 : vector<1x1x256xf32> to vector<1x256xf32>
    %c255_i32 = arith.constant 255 : i32
    %49 = tpu.dynamic_rotate %48 by %c255_i32 dim 1 : vector<1x256xf32>, i32 -> vector<1x256xf32>
    %50 = vector.extract_strided_slice %30 {offsets = [0, 7, 0], sizes = [1, 1, 256], strides = [1, 1, 1]} : vector<1x35x256xf32> to vector<1x1x256xf32>
    %51 = vector.shape_cast %50 : vector<1x1x256xf32> to vector<1x256xf32>
    %c241_i32 = arith.constant 241 : i32
    %52 = tpu.dynamic_rotate %51 by %c241_i32 dim 1 : vector<1x256xf32>, i32 -> vector<1x256xf32>
    %53 = vector.extract_strided_slice %30 {offsets = [0, 8, 0], sizes = [1, 1, 256], strides = [1, 1, 1]} : vector<1x35x256xf32> to vector<1x1x256xf32>
    %54 = vector.shape_cast %53 : vector<1x1x256xf32> to vector<1x256xf32>
    %c240_i32 = arith.constant 240 : i32
    %55 = tpu.dynamic_rotate %54 by %c240_i32 dim 1 : vector<1x256xf32>, i32 -> vector<1x256xf32>
    %56 = vector.extract_strided_slice %30 {offsets = [0, 9, 0], sizes = [1, 1, 256], strides = [1, 1, 1]} : vector<1x35x256xf32> to vector<1x1x256xf32>
    %57 = vector.shape_cast %56 : vector<1x1x256xf32> to vector<1x256xf32>
    %c239_i32 = arith.constant 239 : i32
    %58 = tpu.dynamic_rotate %57 by %c239_i32 dim 1 : vector<1x256xf32>, i32 -> vector<1x256xf32>
    %59 = vector.extract_strided_slice %30 {offsets = [0, 10, 0], sizes = [1, 1, 256], strides = [1, 1, 1]} : vector<1x35x256xf32> to vector<1x1x256xf32>
    %60 = vector.shape_cast %59 : vector<1x1x256xf32> to vector<1x256xf32>
    %c34_i32 = arith.constant 34 : i32
    %61 = tpu.dynamic_rotate %60 by %c34_i32 dim 1 : vector<1x256xf32>, i32 -> vector<1x256xf32>
    %62 = vector.extract_strided_slice %30 {offsets = [0, 11, 0], sizes = [1, 1, 256], strides = [1, 1, 1]} : vector<1x35x256xf32> to vector<1x1x256xf32>
    %63 = vector.shape_cast %62 : vector<1x1x256xf32> to vector<1x256xf32>
    %c33_i32 = arith.constant 33 : i32
    %64 = tpu.dynamic_rotate %63 by %c33_i32 dim 1 : vector<1x256xf32>, i32 -> vector<1x256xf32>
    %65 = vector.extract_strided_slice %30 {offsets = [0, 12, 0], sizes = [1, 1, 256], strides = [1, 1, 1]} : vector<1x35x256xf32> to vector<1x1x256xf32>
    %66 = vector.shape_cast %65 : vector<1x1x256xf32> to vector<1x256xf32>
    %c32_i32 = arith.constant 32 : i32
    %67 = tpu.dynamic_rotate %66 by %c32_i32 dim 1 : vector<1x256xf32>, i32 -> vector<1x256xf32>
    %68 = vector.extract_strided_slice %30 {offsets = [0, 13, 0], sizes = [1, 1, 256], strides = [1, 1, 1]} : vector<1x35x256xf32> to vector<1x1x256xf32>
    %69 = vector.shape_cast %68 : vector<1x1x256xf32> to vector<1x256xf32>
    %c31_i32 = arith.constant 31 : i32
    %70 = tpu.dynamic_rotate %69 by %c31_i32 dim 1 : vector<1x256xf32>, i32 -> vector<1x256xf32>
    %71 = vector.extract_strided_slice %30 {offsets = [0, 14, 0], sizes = [1, 1, 256], strides = [1, 1, 1]} : vector<1x35x256xf32> to vector<1x1x256xf32>
    %72 = vector.shape_cast %71 : vector<1x1x256xf32> to vector<1x256xf32>
    %c30_i32 = arith.constant 30 : i32
    %73 = tpu.dynamic_rotate %72 by %c30_i32 dim 1 : vector<1x256xf32>, i32 -> vector<1x256xf32>
    %74 = vector.extract_strided_slice %30 {offsets = [0, 15, 0], sizes = [1, 1, 256], strides = [1, 1, 1]} : vector<1x35x256xf32> to vector<1x1x256xf32>
    %75 = vector.shape_cast %74 : vector<1x1x256xf32> to vector<1x256xf32>
    %c18_i32 = arith.constant 18 : i32
    %76 = tpu.dynamic_rotate %75 by %c18_i32 dim 1 : vector<1x256xf32>, i32 -> vector<1x256xf32>
    %77 = vector.extract_strided_slice %30 {offsets = [0, 16, 0], sizes = [1, 1, 256], strides = [1, 1, 1]} : vector<1x35x256xf32> to vector<1x1x256xf32>
    %78 = vector.shape_cast %77 : vector<1x1x256xf32> to vector<1x256xf32>
    %c17_i32_19 = arith.constant 17 : i32
    %79 = tpu.dynamic_rotate %78 by %c17_i32_19 dim 1 : vector<1x256xf32>, i32 -> vector<1x256xf32>
    %80 = vector.extract_strided_slice %30 {offsets = [0, 17, 0], sizes = [1, 1, 256], strides = [1, 1, 1]} : vector<1x35x256xf32> to vector<1x1x256xf32>
    %81 = vector.shape_cast %80 : vector<1x1x256xf32> to vector<1x256xf32>
    %c16_i32_20 = arith.constant 16 : i32
    %82 = tpu.dynamic_rotate %81 by %c16_i32_20 dim 1 : vector<1x256xf32>, i32 -> vector<1x256xf32>
    %83 = vector.extract_strided_slice %30 {offsets = [0, 18, 0], sizes = [1, 1, 256], strides = [1, 1, 1]} : vector<1x35x256xf32> to vector<1x1x256xf32>
    %84 = vector.shape_cast %83 : vector<1x1x256xf32> to vector<1x256xf32>
    %c15_i32_21 = arith.constant 15 : i32
    %85 = tpu.dynamic_rotate %84 by %c15_i32_21 dim 1 : vector<1x256xf32>, i32 -> vector<1x256xf32>
    %86 = vector.extract_strided_slice %30 {offsets = [0, 19, 0], sizes = [1, 1, 256], strides = [1, 1, 1]} : vector<1x35x256xf32> to vector<1x1x256xf32>
    %87 = vector.shape_cast %86 : vector<1x1x256xf32> to vector<1x256xf32>
    %c14_i32 = arith.constant 14 : i32
    %88 = tpu.dynamic_rotate %87 by %c14_i32 dim 1 : vector<1x256xf32>, i32 -> vector<1x256xf32>
    %89 = vector.extract_strided_slice %30 {offsets = [0, 20, 0], sizes = [1, 1, 256], strides = [1, 1, 1]} : vector<1x35x256xf32> to vector<1x1x256xf32>
    %90 = vector.shape_cast %89 : vector<1x1x256xf32> to vector<1x256xf32>
    %c2_i32 = arith.constant 2 : i32
    %91 = tpu.dynamic_rotate %90 by %c2_i32 dim 1 : vector<1x256xf32>, i32 -> vector<1x256xf32>
    %92 = vector.extract_strided_slice %30 {offsets = [0, 21, 0], sizes = [1, 1, 256], strides = [1, 1, 1]} : vector<1x35x256xf32> to vector<1x1x256xf32>
    %93 = vector.shape_cast %92 : vector<1x1x256xf32> to vector<1x256xf32>
    %c1_i32_22 = arith.constant 1 : i32
    %94 = tpu.dynamic_rotate %93 by %c1_i32_22 dim 1 : vector<1x256xf32>, i32 -> vector<1x256xf32>
    %95 = vector.extract_strided_slice %30 {offsets = [0, 22, 0], sizes = [1, 1, 256], strides = [1, 1, 1]} : vector<1x35x256xf32> to vector<1x1x256xf32>
    %96 = vector.shape_cast %95 : vector<1x1x256xf32> to vector<1x256xf32>
    %97 = vector.extract_strided_slice %30 {offsets = [0, 23, 0], sizes = [1, 1, 256], strides = [1, 1, 1]} : vector<1x35x256xf32> to vector<1x1x256xf32>
    %98 = vector.shape_cast %97 : vector<1x1x256xf32> to vector<1x256xf32>
    %c255_i32_23 = arith.constant 255 : i32
    %99 = tpu.dynamic_rotate %98 by %c255_i32_23 dim 1 : vector<1x256xf32>, i32 -> vector<1x256xf32>
    %100 = vector.extract_strided_slice %30 {offsets = [0, 24, 0], sizes = [1, 1, 256], strides = [1, 1, 1]} : vector<1x35x256xf32> to vector<1x1x256xf32>
    %101 = vector.shape_cast %100 : vector<1x1x256xf32> to vector<1x256xf32>
    %c254_i32 = arith.constant 254 : i32
    %102 = tpu.dynamic_rotate %101 by %c254_i32 dim 1 : vector<1x256xf32>, i32 -> vector<1x256xf32>
    %103 = vector.extract_strided_slice %30 {offsets = [0, 25, 0], sizes = [1, 1, 256], strides = [1, 1, 1]} : vector<1x35x256xf32> to vector<1x1x256xf32>
    %104 = vector.shape_cast %103 : vector<1x1x256xf32> to vector<1x256xf32>
    %c242_i32 = arith.constant 242 : i32
    %105 = tpu.dynamic_rotate %104 by %c242_i32 dim 1 : vector<1x256xf32>, i32 -> vector<1x256xf32>
    %106 = vector.extract_strided_slice %30 {offsets = [0, 26, 0], sizes = [1, 1, 256], strides = [1, 1, 1]} : vector<1x35x256xf32> to vector<1x1x256xf32>
    %107 = vector.shape_cast %106 : vector<1x1x256xf32> to vector<1x256xf32>
    %c241_i32_24 = arith.constant 241 : i32
    %108 = tpu.dynamic_rotate %107 by %c241_i32_24 dim 1 : vector<1x256xf32>, i32 -> vector<1x256xf32>
    %109 = vector.extract_strided_slice %30 {offsets = [0, 27, 0], sizes = [1, 1, 256], strides = [1, 1, 1]} : vector<1x35x256xf32> to vector<1x1x256xf32>
    %110 = vector.shape_cast %109 : vector<1x1x256xf32> to vector<1x256xf32>
    %c240_i32_25 = arith.constant 240 : i32
    %111 = tpu.dynamic_rotate %110 by %c240_i32_25 dim 1 : vector<1x256xf32>, i32 -> vector<1x256xf32>
    %112 = vector.extract_strided_slice %30 {offsets = [0, 28, 0], sizes = [1, 1, 256], strides = [1, 1, 1]} : vector<1x35x256xf32> to vector<1x1x256xf32>
    %113 = vector.shape_cast %112 : vector<1x1x256xf32> to vector<1x256xf32>
    %c239_i32_26 = arith.constant 239 : i32
    %114 = tpu.dynamic_rotate %113 by %c239_i32_26 dim 1 : vector<1x256xf32>, i32 -> vector<1x256xf32>
    %115 = vector.extract_strided_slice %30 {offsets = [0, 29, 0], sizes = [1, 1, 256], strides = [1, 1, 1]} : vector<1x35x256xf32> to vector<1x1x256xf32>
    %116 = vector.shape_cast %115 : vector<1x1x256xf32> to vector<1x256xf32>
    %c238_i32 = arith.constant 238 : i32
    %117 = tpu.dynamic_rotate %116 by %c238_i32 dim 1 : vector<1x256xf32>, i32 -> vector<1x256xf32>
    %118 = vector.extract_strided_slice %30 {offsets = [0, 30, 0], sizes = [1, 1, 256], strides = [1, 1, 1]} : vector<1x35x256xf32> to vector<1x1x256xf32>
    %119 = vector.shape_cast %118 : vector<1x1x256xf32> to vector<1x256xf32>
    %c226_i32 = arith.constant 226 : i32
    %120 = tpu.dynamic_rotate %119 by %c226_i32 dim 1 : vector<1x256xf32>, i32 -> vector<1x256xf32>
    %121 = vector.extract_strided_slice %30 {offsets = [0, 31, 0], sizes = [1, 1, 256], strides = [1, 1, 1]} : vector<1x35x256xf32> to vector<1x1x256xf32>
    %122 = vector.shape_cast %121 : vector<1x1x256xf32> to vector<1x256xf32>
    %c225_i32 = arith.constant 225 : i32
    %123 = tpu.dynamic_rotate %122 by %c225_i32 dim 1 : vector<1x256xf32>, i32 -> vector<1x256xf32>
    %124 = vector.extract_strided_slice %30 {offsets = [0, 32, 0], sizes = [1, 1, 256], strides = [1, 1, 1]} : vector<1x35x256xf32> to vector<1x1x256xf32>
    %125 = vector.shape_cast %124 : vector<1x1x256xf32> to vector<1x256xf32>
    %c224_i32 = arith.constant 224 : i32
    %126 = tpu.dynamic_rotate %125 by %c224_i32 dim 1 : vector<1x256xf32>, i32 -> vector<1x256xf32>
    %127 = vector.extract_strided_slice %30 {offsets = [0, 33, 0], sizes = [1, 1, 256], strides = [1, 1, 1]} : vector<1x35x256xf32> to vector<1x1x256xf32>
    %128 = vector.shape_cast %127 : vector<1x1x256xf32> to vector<1x256xf32>
    %c223_i32 = arith.constant 223 : i32
    %129 = tpu.dynamic_rotate %128 by %c223_i32 dim 1 : vector<1x256xf32>, i32 -> vector<1x256xf32>
    %130 = vector.extract_strided_slice %30 {offsets = [0, 34, 0], sizes = [1, 1, 256], strides = [1, 1, 1]} : vector<1x35x256xf32> to vector<1x1x256xf32>
    %131 = vector.shape_cast %130 : vector<1x1x256xf32> to vector<1x256xf32>
    %c222_i32 = arith.constant 222 : i32
    %132 = tpu.dynamic_rotate %131 by %c222_i32 dim 1 : vector<1x256xf32>, i32 -> vector<1x256xf32>
    %133 = arith.addf %32, %35 : vector<1x256xf32>
    %134 = arith.addf %38, %41 : vector<1x256xf32>
    %135 = arith.addf %44, %46 : vector<1x256xf32>
    %136 = arith.addf %49, %52 : vector<1x256xf32>
    %137 = arith.addf %55, %58 : vector<1x256xf32>
    %138 = arith.addf %61, %64 : vector<1x256xf32>
    %139 = arith.addf %67, %70 : vector<1x256xf32>
    %140 = arith.addf %73, %76 : vector<1x256xf32>
    %141 = arith.addf %79, %82 : vector<1x256xf32>
    %142 = arith.addf %85, %88 : vector<1x256xf32>
    %143 = arith.addf %91, %94 : vector<1x256xf32>
    %144 = arith.addf %96, %99 : vector<1x256xf32>
    %145 = arith.addf %102, %105 : vector<1x256xf32>
    %146 = arith.addf %108, %111 : vector<1x256xf32>
    %147 = arith.addf %114, %117 : vector<1x256xf32>
    %148 = arith.addf %120, %123 : vector<1x256xf32>
    %149 = arith.addf %126, %129 : vector<1x256xf32>
    %150 = arith.addf %133, %134 : vector<1x256xf32>
    %151 = arith.addf %135, %136 : vector<1x256xf32>
    %152 = arith.addf %137, %138 : vector<1x256xf32>
    %153 = arith.addf %139, %140 : vector<1x256xf32>
    %154 = arith.addf %141, %142 : vector<1x256xf32>
    %155 = arith.addf %143, %144 : vector<1x256xf32>
    %156 = arith.addf %145, %146 : vector<1x256xf32>
    %157 = arith.addf %147, %148 : vector<1x256xf32>
    %158 = arith.addf %149, %132 : vector<1x256xf32>
    %159 = arith.addf %150, %151 : vector<1x256xf32>
    %160 = arith.addf %152, %153 : vector<1x256xf32>
    %161 = arith.addf %154, %155 : vector<1x256xf32>
    %162 = arith.addf %156, %157 : vector<1x256xf32>
    %163 = arith.addf %159, %160 : vector<1x256xf32>
    %164 = arith.addf %161, %162 : vector<1x256xf32>
    %165 = arith.addf %163, %164 : vector<1x256xf32>
    %166 = arith.addf %165, %158 : vector<1x256xf32>
    %c0_27 = arith.constant 0 : index
    %167 = memref.load %arg6[%c0_27] : memref<1xf32, #tpu.memory_space<smem>>
    %168 = vector.broadcast %167 : f32 to vector<1x256xf32>
    %169 = arith.addf %166, %168 : vector<1x256xf32>
    %cst_28 = arith.constant 0.000000e+00 : f32
    %170 = vector.broadcast %cst_28 : f32 to vector<1x256xf32>
    %171 = arith.subf %170, %169 : vector<1x256xf32>
    %172 = math.exp %171 : vector<1x256xf32>
    %cst_29 = arith.constant 1.000000e+00 : f32
    %173 = vector.broadcast %cst_29 : f32 to vector<1x256xf32>
    %174 = arith.addf %173, %172 : vector<1x256xf32>
    %cst_30 = arith.constant 1.000000e+00 : f32
    %175 = vector.broadcast %cst_30 : f32 to vector<1x256xf32>
    %176 = arith.divf %175, %174 : vector<1x256xf32>
    %177 = vector.shape_cast %21 : vector<1x128xf32> to vector<1x128x1xf32>
    %178 = vector.broadcast %177 : vector<1x128x1xf32> to vector<1x128x256xf32>
    %179 = arith.mulf %0, %178 : vector<1x128x256xf32>
    %180 = vector.shape_cast %176 : vector<1x256xf32> to vector<1x1x256xf32>
    %181 = vector.broadcast %180 : vector<1x1x256xf32> to vector<1x128x256xf32>
    %182 = arith.mulf %179, %181 : vector<1x128x256xf32>
    %c0_31 = arith.constant 0 : index
    %c0_32 = arith.constant 0 : index
    %c0_33 = arith.constant 0 : index
    %183 = vector.load %arg7[%c0_31, %c0_32, %c0_33] : memref<1x128x256xf32, #tpu.memory_space<vmem>>, vector<1x128x256xf32>
    tpu.vector_store %arg7[%c0_31, %c0_32, %c0_33], %182 {strides = array<i32>} : memref<1x128x256xf32, #tpu.memory_space<vmem>>, vector<1x128x256xf32>,
    return
  }
  func.func @transform_0(%arg0: i32) -> (i32, i32, i32) {
    %c0_i32 = arith.constant 0 : i32
    %c0_i32_0 = arith.constant 0 : i32
    %c0_i32_1 = arith.constant 0 : i32
    return %arg0, %c0_i32, %c0_i32_0 : i32, i32, i32
  }
  func.func @transform_1(%arg0: i32) -> (i32, i32) {
    %c0_i32 = arith.constant 0 : i32
    %c0_i32_0 = arith.constant 0 : i32
    %c0_i32_1 = arith.constant 0 : i32
    return %c0_i32, %c0_i32_0 : i32, i32
  }
  func.func @transform_2(%arg0: i32) -> (i32, i32) {
    %c0_i32 = arith.constant 0 : i32
    %c0_i32_0 = arith.constant 0 : i32
    %c0_i32_1 = arith.constant 0 : i32
    return %c0_i32, %c0_i32_0 : i32, i32
  }
  func.func @transform_3(%arg0: i32) -> (i32, i32) {
    %c0_i32 = arith.constant 0 : i32
    %c0_i32_0 = arith.constant 0 : i32
    %c0_i32_1 = arith.constant 0 : i32
    return %c0_i32, %c0_i32_0 : i32, i32
  }
  func.func @transform_4(%arg0: i32) -> (i32, i32) {
    %c0_i32 = arith.constant 0 : i32
    %c0_i32_0 = arith.constant 0 : i32
    %c0_i32_1 = arith.constant 0 : i32
    return %c0_i32, %c0_i32_0 : i32, i32
  }
  func.func @transform_5(%arg0: i32) -> i32 {
    %c0_i32 = arith.constant 0 : i32
    %c0_i32_0 = arith.constant 0 : i32
    return %c0_i32 : i32
  }
  func.func @transform_6(%arg0: i32) -> (i32, i32, i32) {
    %c0_i32 = arith.constant 0 : i32
    %c0_i32_0 = arith.constant 0 : i32
    %c0_i32_1 = arith.constant 0 : i32
    return %arg0, %c0_i32, %c0_i32_0 : i32, i32, i32
  }
}

</mosaic_0001>

<llo_original>
// kernel: cbam.1
$region0: #{cbam.1}
  #allocation0 [shape = 'u32[]', space=smem, size = 0x4, offset = 0x4, fixed_abs, tag = 'smem constant byte address 0x4 - core index']
  #allocation1 [shape = 'u32[144,128]{1,0:T(1,128)}', space=vmem, size = 0x12000, scoped, tag = 'internal scratch']
  #allocation2 [shape = 'f32[1]{0:T(128)S(6)}', space=smem, size = 0x200, scoped, tag = 'scoped memory for cbam.1']
  %s0 = inlined_call_operand.vmem [shape: f32[2,128,256], index: 0, kind: input, shape index: {}]
  %s1 = inlined_call_operand.vmem [shape: f32[128,32], index: 1, kind: input, shape index: {}]
  %s2 = inlined_call_operand.vmem [shape: f32[32,128], index: 2, kind: input, shape index: {}]
  %s3 = inlined_call_operand.vmem [shape: f32[35,128], index: 3, kind: input, shape index: {}]
  %s4 = inlined_call_operand.vmem [shape: f32[35,256], index: 4, kind: input, shape index: {}]
  %s5 = inlined_call_operand.<no memory space> [shape: f32[1], index: 5, kind: input, shape index: {}]
  %s6 = inlined_call_operand.vmem [shape: f32[2,128,256], index: 6, kind: output, shape index: {}]
  %s7 = sld [smem:[#allocation0]]
  $region57: #{cbam.1} parent=0
    _
  %s9 = ssub.s32 1, %s7
  %s10 = scalar_select 0, %s9, %s7
  %11 = sst [smem:[#allocation2]] %s5
  loop: start=0, step=1, limit=4
  $region2: #{cbam.1} parent=0 // loop_pre_header
    _
  $region3: #{cbam.1} parent=0 // loop_header
    %s13 = sphi 0, %s17
    %p14 = scmp.ge.s32.totalorder %s13, 4
    %s23 = sphi 0, %s25
    %s26 = sphi 0, %s23
    %s27 = sphi 0, %s26
    %s43 = sphi 0, %s27
    %s47 = sphi 0, %s47
    %s49 = sphi 0, %s47
    %s50 = sphi 0, %s49
    %s64 = sphi 0, %s50
    %s68 = sphi 0, %s68
    %s70 = sphi 0, %s68
    %s71 = sphi 0, %s70
    %s85 = sphi 0, %s71
    %s89 = sphi 0, %s89
    %s91 = sphi 0, %s89
    %s92 = sphi 0, %s91
    %s106 = sphi 0, %s92
    %s110 = sphi 0, %s110
    %s112 = sphi 0, %s110
    %s113 = sphi 0, %s112
    %s127 = sphi 0, %s113
    %s131 = sphi 0, %s131
    %s133 = sphi 0, %s131
    %s134 = sphi 0, %s133
    %s148 = sphi 0, %s134
    %s154 = sphi 0, %s156
    %s157 = sphi 0, %s154
    %s158 = sphi 0, %s157
    %s174 = sphi 0, %s158
  $region4: #{cbam.1} parent=0 // loop_header_branch
    %16 = sbr.rel (%p14) target = $region8
  $region5: #{cbam.1} parent=0 // loop_body
    %s18 = ssub.s32 %s13, 1
    %s19 = ssub.s32 %s13, 2
    %s20 = sadd.s32 %s13, 1
    %s21 = ssub.s32 %s13, %s20
    %p22 = scmp.eq.s32.totalorder %s21, 0
    %s24 = sadd.s32 %s23, 1
    %s25 = scalar_select %p22, %s23, %s24
    %p28 = pneg %p22
    %p29 = scmp.eq.s32.totalorder %s13, 1
    %p30 = por %p28, %p29
    %p31 = scmp.ne.s32.totalorder %s23, %s26
    %p32 = scmp.eq.s32.totalorder %s13, 0
    %p33 = por %p31, %p32
    %p34 = scmp.ne.s32.totalorder %s23, %s26
    %p35 = scmp.eq.s32.totalorder %s18, 1
    %p36 = por %p34, %p35
    %p37 = scmp.ne.s32.totalorder %s26, %s27
    %p38 = scmp.eq.s32.totalorder %s18, 0
    %p39 = por %p37, %p38
    %p40 = scmp.ne.s32.totalorder %s26, %s27
    %p41 = scmp.eq.s32.totalorder %s19, 1
    %p42 = por %p40, %p41
    %p44 = scmp.ne.s32.totalorder %s27, %s43
    %p45 = scmp.eq.s32.totalorder %s19, 0
    %p46 = por %p44, %p45
    %s48 = sadd.s32 %s47, 1
    %p51 = scmp.eq.s32.totalorder %s13, 1
    %p52 = scmp.ne.s32.totalorder %s47, %s49
    %p53 = scmp.eq.s32.totalorder %s13, 0
    %p54 = por %p52, %p53
    %p55 = scmp.ne.s32.totalorder %s47, %s49
    %p56 = scmp.eq.s32.totalorder %s18, 1
    %p57 = por %p55, %p56
    %p58 = scmp.ne.s32.totalorder %s49, %s50
    %p59 = scmp.eq.s32.totalorder %s18, 0
    %p60 = por %p58, %p59
    %p61 = scmp.ne.s32.totalorder %s49, %s50
    %p62 = scmp.eq.s32.totalorder %s19, 1
    %p63 = por %p61, %p62
    %p65 = scmp.ne.s32.totalorder %s50, %s64
    %p66 = scmp.eq.s32.totalorder %s19, 0
    %p67 = por %p65, %p66
    %s69 = sadd.s32 %s68, 1
    %p72 = scmp.eq.s32.totalorder %s13, 1
    %p73 = scmp.ne.s32.totalorder %s68, %s70
    %p74 = scmp.eq.s32.totalorder %s13, 0
    %p75 = por %p73, %p74
    %p76 = scmp.ne.s32.totalorder %s68, %s70
    %p77 = scmp.eq.s32.totalorder %s18, 1
    %p78 = por %p76, %p77
    %p79 = scmp.ne.s32.totalorder %s70, %s71
    %p80 = scmp.eq.s32.totalorder %s18, 0
    %p81 = por %p79, %p80
    %p82 = scmp.ne.s32.totalorder %s70, %s71
    %p83 = scmp.eq.s32.totalorder %s19, 1
    %p84 = por %p82, %p83
    %p86 = scmp.ne.s32.totalorder %s71, %s85
    %p87 = scmp.eq.s32.totalorder %s19, 0
    %p88 = por %p86, %p87
    %s90 = sadd.s32 %s89, 1
    %p93 = scmp.eq.s32.totalorder %s13, 1
    %p94 = scmp.ne.s32.totalorder %s89, %s91
    %p95 = scmp.eq.s32.totalorder %s13, 0
    %p96 = por %p94, %p95
    %p97 = scmp.ne.s32.totalorder %s89, %s91
    %p98 = scmp.eq.s32.totalorder %s18, 1
    %p99 = por %p97, %p98
    %p100 = scmp.ne.s32.totalorder %s91, %s92
    %p101 = scmp.eq.s32.totalorder %s18, 0
    %p102 = por %p100, %p101
    %p103 = scmp.ne.s32.totalorder %s91, %s92
    %p104 = scmp.eq.s32.totalorder %s19, 1
    %p105 = por %p103, %p104
    %p107 = scmp.ne.s32.totalorder %s92, %s106
    %p108 = scmp.eq.s32.totalorder %s19, 0
    %p109 = por %p107, %p108
    %s111 = sadd.s32 %s110, 1
    %p114 = scmp.eq.s32.totalorder %s13, 1
    %p115 = scmp.ne.s32.totalorder %s110, %s112
    %p116 = scmp.eq.s32.totalorder %s13, 0
    %p117 = por %p115, %p116
    %p118 = scmp.ne.s32.totalorder %s110, %s112
    %p119 = scmp.eq.s32.totalorder %s18, 1
    %p120 = por %p118, %p119
    %p121 = scmp.ne.s32.totalorder %s112, %s113
    %p122 = scmp.eq.s32.totalorder %s18, 0
    %p123 = por %p121, %p122
    %p124 = scmp.ne.s32.totalorder %s112, %s113
    %p125 = scmp.eq.s32.totalorder %s19, 1
    %p126 = por %p124, %p125
    %p128 = scmp.ne.s32.totalorder %s113, %s127
    %p129 = scmp.eq.s32.totalorder %s19, 0
    %p130 = por %p128, %p129
    %s132 = sadd.s32 %s131, 1
    %p135 = scmp.eq.s32.totalorder %s13, 1
    %p136 = scmp.ne.s32.totalorder %s131, %s133
    %p137 = scmp.eq.s32.totalorder %s13, 0
    %p138 = por %p136, %p137
    %p139 = scmp.ne.s32.totalorder %s131, %s133
    %p140 = scmp.eq.s32.totalorder %s18, 1
    %p141 = por %p139, %p140
    %p142 = scmp.ne.s32.totalorder %s133, %s134
    %p143 = scmp.eq.s32.totalorder %s18, 0
    %p144 = por %p142, %p143
    %p145 = scmp.ne.s32.totalorder %s133, %s134
    %p146 = scmp.eq.s32.totalorder %s19, 1
    %p147 = por %p145, %p146
    %p149 = scmp.ne.s32.totalorder %s134, %s148
    %p150 = scmp.eq.s32.totalorder %s19, 0
    %p151 = por %p149, %p150
    %s152 = ssub.s32 %s13, %s20
    %p153 = scmp.eq.s32.totalorder %s152, 0
    %s155 = sadd.s32 %s154, 1
    %s156 = scalar_select %p153, %s154, %s155
    %p159 = pneg %p153
    %p160 = scmp.eq.s32.totalorder %s13, 1
    %p161 = por %p159, %p160
    %p162 = scmp.ne.s32.totalorder %s154, %s157
    %p163 = scmp.eq.s32.totalorder %s13, 0
    %p164 = por %p162, %p163
    %p165 = scmp.ne.s32.totalorder %s154, %s157
    %p166 = scmp.eq.s32.totalorder %s18, 1
    %p167 = por %p165, %p166
    %p168 = scmp.ne.s32.totalorder %s157, %s158
    %p169 = scmp.eq.s32.totalorder %s18, 0
    %p170 = por %p168, %p169
    %p171 = scmp.ne.s32.totalorder %s157, %s158
    %p172 = scmp.eq.s32.totalorder %s19, 1
    %p173 = por %p171, %p172
    %p175 = scmp.ne.s32.totalorder %s158, %s174
    %p176 = scmp.eq.s32.totalorder %s19, 0
    %p177 = por %p175, %p176
    %p178 = scmp.le.s32.totalorder 1, %s13
    %p179 = scmp.lt.s32.totalorder %s13, 3
    %p180 = pnand %p178, %p179
    %p181 = pneg %p180
    // Predicated region
    $region9: #{cbam.1} parent=5 // pred_check
      _
    $region10: #{cbam.1} parent=5 // pred_check_branch
      %183 = sbr.rel (%p180) target = $region12
    $region11: #{cbam.1} parent=5 // pred_region
      %s184 = ssub.s32 %s13, 1
      // Predicated region
      $region13: #{cbam.1} parent=11 // pred_check
        %p185 = pneg %p60
      $region14: #{cbam.1} parent=11 // pred_check_branch
        %187 = sbr.rel (%p185) target = $region16
      $region15: #{cbam.1} parent=11 // pred_region
        _
      $region16: #{cbam.1} parent=11 // pred_fallthru
        _
      // Predicated region
      $region17: #{cbam.1} parent=11 // pred_check
        %p188 = pneg %p81
      $region18: #{cbam.1} parent=11 // pred_check_branch
        %190 = sbr.rel (%p188) target = $region20
      $region19: #{cbam.1} parent=11 // pred_region
        _
      $region20: #{cbam.1} parent=11 // pred_fallthru
        _
      // Predicated region
      $region21: #{cbam.1} parent=11 // pred_check
        %p191 = pneg %p102
      $region22: #{cbam.1} parent=11 // pred_check_branch
        %193 = sbr.rel (%p191) target = $region24
      $region23: #{cbam.1} parent=11 // pred_region
        _
      $region24: #{cbam.1} parent=11 // pred_fallthru
        _
      // Predicated region
      $region25: #{cbam.1} parent=11 // pred_check
        %p194 = pneg %p123
      $region26: #{cbam.1} parent=11 // pred_check_branch
        %196 = sbr.rel (%p194) target = $region28
      $region27: #{cbam.1} parent=11 // pred_region
        _
      $region28: #{cbam.1} parent=11 // pred_fallthru
        _
      // Predicated region
      $region29: #{cbam.1} parent=11 // pred_check
        %p197 = pneg %p144
      $region30: #{cbam.1} parent=11 // pred_check_branch
        %199 = sbr.rel (%p197) target = $region32
      $region31: #{cbam.1} parent=11 // pred_region
        _
      $region32: #{cbam.1} parent=11 // pred_fallthru
        _
    $region12: #{cbam.1} parent=5 // pred_fallthru
      _
    %p200 = scmp.lt.s32.totalorder %s13, 2
    // Predicated region
    $region33: #{cbam.1} parent=5 // pred_check
      %p201 = pneg %p200
    $region34: #{cbam.1} parent=5 // pred_check_branch
      %203 = sbr.rel (%p201) target = $region36
    $region35: #{cbam.1} parent=5 // pred_region
      // Predicated region
      $region37: #{cbam.1} parent=35 // pred_check
        %p204 = pneg %p33
      $region38: #{cbam.1} parent=35 // pred_check_branch
        %206 = sbr.rel (%p204) target = $region40
      $region39: #{cbam.1} parent=35 // pred_region
        %p207 = scmp.lt.s32.totalorder %s13, 1
        %s208 = scalar_select %p207, %s13, 1
        %s209 = smul.addr %s208, 32
        %s210 = smul.addr %s209, 8
        %s211 = scalar_lea.vmem %s0, %s210
      $region40: #{cbam.1} parent=35 // pred_fallthru
        _
    $region36: #{cbam.1} parent=5 // pred_fallthru
      _
    %p212 = scmp.le.s32.totalorder 1, %s13
    %p213 = scmp.lt.s32.totalorder %s13, 3
    %p214 = pnand %p212, %p213
    %p215 = pneg %p214
    // Predicated region
    $region41: #{cbam.1} parent=5 // pred_check
      _
    $region42: #{cbam.1} parent=5 // pred_check_branch
      %217 = sbr.rel (%p214) target = $region44
    $region43: #{cbam.1} parent=5 // pred_region
      %s218 = ssub.s32 %s13, 1
      %p219 = scmp.lt.s32.totalorder %s18, 1
      %s220 = scalar_select %p219, %s18, 1
      %s221 = smul.addr %s220, 32
      %s222 = smul.addr %s221, 8
      %s223 = scalar_lea.vmem %s0, %s222
      %p224 = pneg %p39
      %p225 = pneg %p36
      %p226 = pneg %p60
      %p227 = pneg %p57
      %p228 = pneg %p81
      %p229 = pneg %p78
      %p230 = pneg %p102
      %p231 = pneg %p99
      %p232 = pneg %p123
      %p233 = pneg %p120
      %p234 = pneg %p144
      %p235 = pneg %p141
      %p236 = pneg %p170
      %p237 = pneg %p167
      %p238 = scmp.lt.s32.totalorder %s18, 1
      %s239 = scalar_select %p238, %s18, 1
      %s240 = smul.addr %s239, 32
      %s241 = smul.addr %s240, 8
      %s242 = scalar_lea.vmem %s6, %s241
      %p243 = scmp.lt.s32.totalorder %s18, 1
      %s244 = scalar_select %p243, %s18, 1
      %s245 = smul.addr %s244, 32
      %s246 = smul.addr %s245, 8
      %s247 = scalar_lea.vmem %s0, %s246
      %p248 = scmp.lt.s32.totalorder %s18, 1
      %s249 = scalar_select %p248, %s18, 1
      %s250 = smul.addr %s249, 32
      %s251 = smul.addr %s250, 8
      %s252 = scalar_lea.vmem %s6, %s251
      %v253 = vld [vmem:[%s247] sm:$0xff]
      %v254 = vld [vmem:[%s247 + $0x8] sm:$0xff]
      %v255 = vld [vmem:[%s247 + $0x10] sm:$0xff]
      %v256 = vld [vmem:[%s247 + $0x18] sm:$0xff]
      %v257 = vld [vmem:[%s247 + $0x20] sm:$0xff]
      %v258 = vld [vmem:[%s247 + $0x28] sm:$0xff]
      %v259 = vld [vmem:[%s247 + $0x30] sm:$0xff]
      %v260 = vld [vmem:[%s247 + $0x38] sm:$0xff]
      %v261 = vld [vmem:[%s247 + $0x40] sm:$0xff]
      %v262 = vld [vmem:[%s247 + $0x48] sm:$0xff]
      %v263 = vld [vmem:[%s247 + $0x50] sm:$0xff]
      %v264 = vld [vmem:[%s247 + $0x58] sm:$0xff]
      %v265 = vld [vmem:[%s247 + $0x60] sm:$0xff]
      %v266 = vld [vmem:[%s247 + $0x68] sm:$0xff]
      %v267 = vld [vmem:[%s247 + $0x70] sm:$0xff]
      %v268 = vld [vmem:[%s247 + $0x78] sm:$0xff]
      %v269 = vld [vmem:[%s247 + $0x80] sm:$0xff]
      %v270 = vld [vmem:[%s247 + $0x88] sm:$0xff]
      %v271 = vld [vmem:[%s247 + $0x90] sm:$0xff]
      %v272 = vld [vmem:[%s247 + $0x98] sm:$0xff]
      %v273 = vld [vmem:[%s247 + $0xa0] sm:$0xff]
      %v274 = vld [vmem:[%s247 + $0xa8] sm:$0xff]
      %v275 = vld [vmem:[%s247 + $0xb0] sm:$0xff]
      %v276 = vld [vmem:[%s247 + $0xb8] sm:$0xff]
      %v277 = vld [vmem:[%s247 + $0xc0] sm:$0xff]
      %v278 = vld [vmem:[%s247 + $0xc8] sm:$0xff]
      %v279 = vld [vmem:[%s247 + $0xd0] sm:$0xff]
      %v280 = vld [vmem:[%s247 + $0xd8] sm:$0xff]
      %v281 = vld [vmem:[%s247 + $0xe0] sm:$0xff]
      %v282 = vld [vmem:[%s247 + $0xe8] sm:$0xff]
      %v283 = vld [vmem:[%s247 + $0xf0] sm:$0xff]
      %v284 = vld [vmem:[%s247 + $0xf8] sm:$0xff]
      %v285 = vadd.f32 %v253, %v254
      %286 = vadd.xlane.f32.xlu0 %v285
      %v287 = vpop.xlane.xlu0 %286
      %v288 = vadd.f32 %v255, %v256
      %289 = vadd.xlane.f32.xlu0 %v288
      %v290 = vpop.xlane.xlu0 %289
      %v291 = vadd.f32 %v257, %v258
      %292 = vadd.xlane.f32.xlu0 %v291
      %v293 = vpop.xlane.xlu0 %292
      %v294 = vadd.f32 %v259, %v260
      %295 = vadd.xlane.f32.xlu0 %v294
      %v296 = vpop.xlane.xlu0 %295
      %v297 = vadd.f32 %v261, %v262
      %298 = vadd.xlane.f32.xlu0 %v297
      %v299 = vpop.xlane.xlu0 %298
      %v300 = vadd.f32 %v263, %v264
      %301 = vadd.xlane.f32.xlu0 %v300
      %v302 = vpop.xlane.xlu0 %301
      %v303 = vadd.f32 %v265, %v266
      %304 = vadd.xlane.f32.xlu0 %v303
      %v305 = vpop.xlane.xlu0 %304
      %v306 = vadd.f32 %v267, %v268
      %307 = vadd.xlane.f32.xlu0 %v306
      %v308 = vpop.xlane.xlu0 %307
      %v309 = vadd.f32 %v269, %v270
      %310 = vadd.xlane.f32.xlu0 %v309
      %v311 = vpop.xlane.xlu0 %310
      %v312 = vadd.f32 %v271, %v272
      %313 = vadd.xlane.f32.xlu0 %v312
      %v314 = vpop.xlane.xlu0 %313
      %v315 = vadd.f32 %v273, %v274
      %316 = vadd.xlane.f32.xlu0 %v315
      %v317 = vpop.xlane.xlu0 %316
      %v318 = vadd.f32 %v275, %v276
      %319 = vadd.xlane.f32.xlu0 %v318
      %v320 = vpop.xlane.xlu0 %319
      %v321 = vadd.f32 %v277, %v278
      %322 = vadd.xlane.f32.xlu0 %v321
      %v323 = vpop.xlane.xlu0 %322
      %v324 = vadd.f32 %v279, %v280
      %325 = vadd.xlane.f32.xlu0 %v324
      %v326 = vpop.xlane.xlu0 %325
      %v327 = vadd.f32 %v281, %v282
      %328 = vadd.xlane.f32.xlu0 %v327
      %v329 = vpop.xlane.xlu0 %328
      %v330 = vadd.f32 %v283, %v284
      %331 = vadd.xlane.f32.xlu0 %v330
      %v332 = vpop.xlane.xlu0 %331
      %v333 = vrcp.pop 256.0
      %v334 = vmul.f32 %v287, %v333
      %v335 = vmul.f32 %v290, %v333
      %v336 = vmul.f32 %v293, %v333
      %v337 = vmul.f32 %v296, %v333
      %v338 = vmul.f32 %v299, %v333
      %v339 = vmul.f32 %v302, %v333
      %v340 = vmul.f32 %v305, %v333
      %v341 = vmul.f32 %v308, %v333
      %v342 = vmul.f32 %v311, %v333
      %v343 = vmul.f32 %v314, %v333
      %v344 = vmul.f32 %v317, %v333
      %v345 = vmul.f32 %v320, %v333
      %v346 = vmul.f32 %v323, %v333
      %v347 = vmul.f32 %v326, %v333
      %v348 = vmul.f32 %v329, %v333
      %v349 = vmul.f32 %v332, %v333
      %v350 = vmax.f32 %v253, %v254
      %351 = vmax.xlane.f32.xlu0 %v350
      %v352 = vpop.xlane.xlu0 %351
      %v353 = vmax.f32 %v255, %v256
      %354 = vmax.xlane.f32.xlu0 %v353
      %v355 = vpop.xlane.xlu0 %354
      %v356 = vmax.f32 %v257, %v258
      %357 = vmax.xlane.f32.xlu0 %v356
      %v358 = vpop.xlane.xlu0 %357
      %v359 = vmax.f32 %v259, %v260
      %360 = vmax.xlane.f32.xlu0 %v359
      %v361 = vpop.xlane.xlu0 %360
      %v362 = vmax.f32 %v261, %v262
      %363 = vmax.xlane.f32.xlu0 %v362
      %v364 = vpop.xlane.xlu0 %363
      %v365 = vmax.f32 %v263, %v264
      %366 = vmax.xlane.f32.xlu0 %v365
      %v367 = vpop.xlane.xlu0 %366
      %v368 = vmax.f32 %v265, %v266
      %369 = vmax.xlane.f32.xlu0 %v368
      %v370 = vpop.xlane.xlu0 %369
      %v371 = vmax.f32 %v267, %v268
      %372 = vmax.xlane.f32.xlu0 %v371
      %v373 = vpop.xlane.xlu0 %372
      %v374 = vmax.f32 %v269, %v270
      %375 = vmax.xlane.f32.xlu0 %v374
      %v376 = vpop.xlane.xlu0 %375
      %v377 = vmax.f32 %v271, %v272
      %378 = vmax.xlane.f32.xlu0 %v377
      %v379 = vpop.xlane.xlu0 %378
      %v380 = vmax.f32 %v273, %v274
      %381 = vmax.xlane.f32.xlu0 %v380
      %v382 = vpop.xlane.xlu0 %381
      %v383 = vmax.f32 %v275, %v276
      %384 = vmax.xlane.f32.xlu0 %v383
      %v385 = vpop.xlane.xlu0 %384
      %v386 = vmax.f32 %v277, %v278
      %387 = vmax.xlane.f32.xlu0 %v386
      %v388 = vpop.xlane.xlu0 %387
      %v389 = vmax.f32 %v279, %v280
      %390 = vmax.xlane.f32.xlu0 %v389
      %v391 = vpop.xlane.xlu0 %390
      %v392 = vmax.f32 %v281, %v282
      %393 = vmax.xlane.f32.xlu0 %v392
      %v394 = vpop.xlane.xlu0 %393
      %v395 = vmax.f32 %v283, %v284
      %396 = vmax.xlane.f32.xlu0 %v395
      %v397 = vpop.xlane.xlu0 %396
      %v414 = vlaneseq
      %v415 = vand.u32 %v414, 127
      %v416 = vlaneseq
      %v417 = vshrl.u32 %v416, 7
      %v418 = vsub.s32 %v415, %v417
      %v419 = vrot.slane %v334, %v418
      %v420 = vadd.s32 %v415, 4294967288
      %v421 = vlaneseq
      %v422 = vshrl.u32 %v421, 7
      %v423 = vsub.s32 %v420, %v422
      %v424 = vrot.slane %v335, %v423
      %vm425 = vcmask 130112
      %v426 = vsel %vm425, %v424, %v419
      %v427 = vadd.s32 %v415, 4294967280
      %v428 = vlaneseq
      %v429 = vshrl.u32 %v428, 7
      %v430 = vsub.s32 %v427, %v429
      %v431 = vrot.slane %v336, %v430
      %vm432 = vcmask 195712
      %v433 = vsel %vm432, %v431, %v426
      %v434 = vadd.s32 %v415, 4294967272
      %v435 = vlaneseq
      %v436 = vshrl.u32 %v435, 7
      %v437 = vsub.s32 %v434, %v436
      %v438 = vrot.slane %v337, %v437
      %vm439 = vcmask 261312
      %v440 = vsel %vm439, %v438, %v433
      %v441 = vadd.s32 %v415, 4294967264
      %v442 = vlaneseq
      %v443 = vshrl.u32 %v442, 7
      %v444 = vsub.s32 %v441, %v443
      %v445 = vrot.slane %v338, %v444
      %vm446 = vcmask 326912
      %v447 = vsel %vm446, %v445, %v440
      %v448 = vadd.s32 %v415, 4294967256
      %v449 = vlaneseq
      %v450 = vshrl.u32 %v449, 7
      %v451 = vsub.s32 %v448, %v450
      %v452 = vrot.slane %v339, %v451
      %vm453 = vcmask 392512
      %v454 = vsel %vm453, %v452, %v447
      %v455 = vadd.s32 %v415, 4294967248
      %v456 = vlaneseq
      %v457 = vshrl.u32 %v456, 7
      %v458 = vsub.s32 %v455, %v457
      %v459 = vrot.slane %v340, %v458
      %vm460 = vcmask 458112
      %v461 = vsel %vm460, %v459, %v454
      %v462 = vadd.s32 %v415, 4294967240
      %v463 = vlaneseq
      %v464 = vshrl.u32 %v463, 7
      %v465 = vsub.s32 %v462, %v464
      %v466 = vrot.slane %v341, %v465
      %vm467 = vcmask 523712
      %v468 = vsel %vm467, %v466, %v461
      %v469 = vadd.s32 %v415, 4294967232
      %v470 = vlaneseq
      %v471 = vshrl.u32 %v470, 7
      %v472 = vsub.s32 %v469, %v471
      %v473 = vrot.slane %v342, %v472
      %vm474 = vcmask 589312
      %v475 = vsel %vm474, %v473, %v468
      %v476 = vadd.s32 %v415, 4294967224
      %v477 = vlaneseq
      %v478 = vshrl.u32 %v477, 7
      %v479 = vsub.s32 %v476, %v478
      %v480 = vrot.slane %v343, %v479
      %vm481 = vcmask 654912
      %v482 = vsel %vm481, %v480, %v475
      %v483 = vadd.s32 %v415, 4294967216
      %v484 = vlaneseq
      %v485 = vshrl.u32 %v484, 7
      %v486 = vsub.s32 %v483, %v485
      %v487 = vrot.slane %v344, %v486
      %vm488 = vcmask 720512
      %v489 = vsel %vm488, %v487, %v482
      %v490 = vadd.s32 %v415, 4294967208
      %v491 = vlaneseq
      %v492 = vshrl.u32 %v491, 7
      %v493 = vsub.s32 %v490, %v492
      %v494 = vrot.slane %v345, %v493
      %vm495 = vcmask 786112
      %v496 = vsel %vm495, %v494, %v489
      %v497 = vadd.s32 %v415, 4294967200
      %v498 = vlaneseq
      %v499 = vshrl.u32 %v498, 7
      %v500 = vsub.s32 %v497, %v499
      %v501 = vrot.slane %v346, %v500
      %vm502 = vcmask 851712
      %v503 = vsel %vm502, %v501, %v496
      %v504 = vadd.s32 %v415, 4294967192
      %v505 = vlaneseq
      %v506 = vshrl.u32 %v505, 7
      %v507 = vsub.s32 %v504, %v506
      %v508 = vrot.slane %v347, %v507
      %vm509 = vcmask 917312
      %v510 = vsel %vm509, %v508, %v503
      %v511 = vadd.s32 %v415, 4294967184
      %v512 = vlaneseq
      %v513 = vshrl.u32 %v512, 7
      %v514 = vsub.s32 %v511, %v513
      %v515 = vrot.slane %v348, %v514
      %vm516 = vcmask 982912
      %v517 = vsel %vm516, %v515, %v510
      %v518 = vadd.s32 %v415, 4294967176
      %v519 = vlaneseq
      %v520 = vshrl.u32 %v519, 7
      %v521 = vsub.s32 %v518, %v520
      %v522 = vrot.slane %v349, %v521
      %vm523 = vcmask 1048512
      %v524 = vsel %vm523, %v522, %v517
      %v542 = vlaneseq
      %v543 = vshrl.u32 %v542, 7
      %v544 = vsub.s32 %v415, %v543
      %v545 = vrot.slane %v352, %v544
      %v546 = vlaneseq
      %v547 = vshrl.u32 %v546, 7
      %v548 = vsub.s32 %v420, %v547
      %v549 = vrot.slane %v355, %v548
      %v550 = vsel %vm425, %v549, %v545
      %v551 = vlaneseq
      %v552 = vshrl.u32 %v551, 7
      %v553 = vsub.s32 %v427, %v552
      %v554 = vrot.slane %v358, %v553
      %v555 = vsel %vm432, %v554, %v550
      %v556 = vlaneseq
      %v557 = vshrl.u32 %v556, 7
      %v558 = vsub.s32 %v434, %v557
      %v559 = vrot.slane %v361, %v558
      %v560 = vsel %vm439, %v559, %v555
      %v561 = vlaneseq
      %v562 = vshrl.u32 %v561, 7
      %v563 = vsub.s32 %v441, %v562
      %v564 = vrot.slane %v364, %v563
      %v565 = vsel %vm446, %v564, %v560
      %v566 = vlaneseq
      %v567 = vshrl.u32 %v566, 7
      %v568 = vsub.s32 %v448, %v567
      %v569 = vrot.slane %v367, %v568
      %v570 = vsel %vm453, %v569, %v565
      %v571 = vlaneseq
      %v572 = vshrl.u32 %v571, 7
      %v573 = vsub.s32 %v455, %v572
      %v574 = vrot.slane %v370, %v573
      %v575 = vsel %vm460, %v574, %v570
      %v576 = vlaneseq
      %v577 = vshrl.u32 %v576, 7
      %v578 = vsub.s32 %v462, %v577
      %v579 = vrot.slane %v373, %v578
      %v580 = vsel %vm467, %v579, %v575
      %v581 = vlaneseq
      %v582 = vshrl.u32 %v581, 7
      %v583 = vsub.s32 %v469, %v582
      %v584 = vrot.slane %v376, %v583
      %v585 = vsel %vm474, %v584, %v580
      %v586 = vlaneseq
      %v587 = vshrl.u32 %v586, 7
      %v588 = vsub.s32 %v476, %v587
      %v589 = vrot.slane %v379, %v588
      %v590 = vsel %vm481, %v589, %v585
      %v591 = vlaneseq
      %v592 = vshrl.u32 %v591, 7
      %v593 = vsub.s32 %v483, %v592
      %v594 = vrot.slane %v382, %v593
      %v595 = vsel %vm488, %v594, %v590
      %v596 = vlaneseq
      %v597 = vshrl.u32 %v596, 7
      %v598 = vsub.s32 %v490, %v597
      %v599 = vrot.slane %v385, %v598
      %v600 = vsel %vm495, %v599, %v595
      %v601 = vlaneseq
      %v602 = vshrl.u32 %v601, 7
      %v603 = vsub.s32 %v497, %v602
      %v604 = vrot.slane %v388, %v603
      %v605 = vsel %vm502, %v604, %v600
      %v606 = vlaneseq
      %v607 = vshrl.u32 %v606, 7
      %v608 = vsub.s32 %v504, %v607
      %v609 = vrot.slane %v391, %v608
      %v610 = vsel %vm509, %v609, %v605
      %v611 = vlaneseq
      %v612 = vshrl.u32 %v611, 7
      %v613 = vsub.s32 %v511, %v612
      %v614 = vrot.slane %v394, %v613
      %v615 = vsel %vm516, %v614, %v610
      %v616 = vlaneseq
      %v617 = vshrl.u32 %v616, 7
      %v618 = vsub.s32 %v518, %v617
      %v619 = vrot.slane %v397, %v618
      %v620 = vsel %vm523, %v619, %v615
      %vm622 = vcmask 1040384
      %v623 = vsel %vm622, %v524, %v620
      %v624 = vld [vmem:[%s1] sm:$0xff]
      %v625 = vld [vmem:[%s1 + $0x8] sm:$0xff]
      %v626 = vld [vmem:[%s1 + $0x10] sm:$0xff]
      %v627 = vld [vmem:[%s1 + $0x18] sm:$0xff]
      %v628 = vld [vmem:[%s1 + $0x20] sm:$0xff]
      %v629 = vld [vmem:[%s1 + $0x28] sm:$0xff]
      %v630 = vld [vmem:[%s1 + $0x30] sm:$0xff]
      %v631 = vld [vmem:[%s1 + $0x38] sm:$0xff]
      %v632 = vld [vmem:[%s1 + $0x40] sm:$0xff]
      %v633 = vld [vmem:[%s1 + $0x48] sm:$0xff]
      %v634 = vld [vmem:[%s1 + $0x50] sm:$0xff]
      %v635 = vld [vmem:[%s1 + $0x58] sm:$0xff]
      %v636 = vld [vmem:[%s1 + $0x60] sm:$0xff]
      %v637 = vld [vmem:[%s1 + $0x68] sm:$0xff]
      %v638 = vld [vmem:[%s1 + $0x70] sm:$0xff]
      %v639 = vld [vmem:[%s1 + $0x78] sm:$0xff]
      %640 = vmatprep.subr.mxu0 0.0
      %641 = vmatpush1.msra.mxu0 %v639
      %642 = vmatprep.subr.mxu0 0.0
      %643 = vmatpush1.msra.mxu0 %v638
      %644 = vmatprep.subr.mxu0 0.0
      %645 = vmatpush1.msra.mxu0 %v637
      %646 = vmatprep.subr.mxu0 0.0
      %647 = vmatpush1.msra.mxu0 %v636
      %648 = vmatprep.subr.mxu0 0.0
      %649 = vmatpush1.msra.mxu0 %v635
      %650 = vmatprep.subr.mxu0 0.0
      %651 = vmatpush1.msra.mxu0 %v634
      %652 = vmatprep.subr.mxu0 0.0
      %653 = vmatpush1.msra.mxu0 %v633
      %654 = vmatprep.subr.mxu0 0.0
      %655 = vmatpush1.msra.mxu0 %v632
      %656 = vmatprep.subr.mxu0 0.0
      %657 = vmatpush1.msra.mxu0 %v631
      %658 = vmatprep.subr.mxu0 0.0
      %659 = vmatpush1.msra.mxu0 %v630
      %660 = vmatprep.subr.mxu0 0.0
      %661 = vmatpush1.msra.mxu0 %v629
      %662 = vmatprep.subr.mxu0 0.0
      %663 = vmatpush1.msra.mxu0 %v628
      %664 = vmatprep.subr.mxu0 0.0
      %665 = vmatpush1.msra.mxu0 %v627
      %666 = vmatprep.subr.mxu0 0.0
      %667 = vmatpush1.msra.mxu0 %v626
      %668 = vmatprep.subr.mxu0 0.0
      %669 = vmatpush1.msra.mxu0 %v625
      %670 = vmatprep.subr.mxu0 0.0
      %671 = vmatpush1.msra.mxu0 %v624
      %672 = vmatprep.subr.mxu0 0.0
      %673 = vmatpush2.msra.mxu0 0.0
      %674 = vmatprep.subr.mxu0 0.0
      %675 = vmatpush2.msra.mxu0 0.0
      %676 = vmatprep.subr.mxu0 0.0
      %677 = vmatpush2.msra.mxu0 0.0
      %678 = vmatprep.subr.mxu0 0.0
      %679 = vmatpush2.msra.mxu0 0.0
      %680 = vmatprep.subr.mxu0 0.0
      %681 = vmatpush2.msra.mxu0 0.0
      %682 = vmatprep.subr.mxu0 0.0
      %683 = vmatpush2.msra.mxu0 0.0
      %684 = vmatprep.subr.mxu0 0.0
      %685 = vmatpush2.msra.mxu0 0.0
      %686 = vmatprep.subr.mxu0 0.0
      %687 = vmatpush2.msra.mxu0 0.0
      %688 = vmatprep.subr.mxu0 0.0
      %689 = vmatpush2.msra.mxu0 0.0
      %690 = vmatprep.subr.mxu0 0.0
      %691 = vmatpush2.msra.mxu0 0.0
      %692 = vmatprep.subr.mxu0 0.0
      %693 = vmatpush2.msra.mxu0 0.0
      %694 = vmatprep.subr.mxu0 0.0
      %695 = vmatpush2.msra.mxu0 0.0
      %696 = vmatprep.subr.mxu0 0.0
      %697 = vmatpush2.msra.mxu0 0.0
      %698 = vmatprep.subr.mxu0 0.0
      %699 = vmatpush2.msra.mxu0 0.0
      %700 = vmatprep.subr.mxu0 0.0
      %701 = vmatpush2.msra.mxu0 0.0
      %702 = vmatprep.subr.mxu0 0.0
      %703 = vmatpush2.msra.mxu0 0.0
      %704 = vmatprep.mubr.f32.mxu0 0.0
      %705 = vmatmul.mubr.f32.gmra.mxu0 %v623
      %v706 = vpop.f32.mrf.mxu0
      %v707 = vadd.f32 0.0, %v706
      %v708 = vpop.f32.mrf.mxu0
      %709 = vdwg.mxu0
      %v710 = vmax.f32 %v707, 0.0
      %v711 = vld [vmem:[%s2] sm:$0xff]
      %v712 = vld [vmem:[%s2 + $0x8] sm:$0xff]
      %v713 = vld [vmem:[%s2 + $0x10] sm:$0xff]
      %v714 = vld [vmem:[%s2 + $0x18] sm:$0xff]
      %vm715 = vcmask 261120
      %v717 = vsel %vm715, %v710, 0
      %719 = vmatprep.subr.mxu0 0.0
      %720 = vmatpush1.msra.mxu0 0.0
      %721 = vmatprep.subr.mxu0 0.0
      %722 = vmatpush1.msra.mxu0 0.0
      %723 = vmatprep.subr.mxu0 0.0
      %724 = vmatpush1.msra.mxu0 0.0
      %725 = vmatprep.subr.mxu0 0.0
      %726 = vmatpush1.msra.mxu0 0.0
      %727 = vmatprep.subr.mxu0 0.0
      %728 = vmatpush1.msra.mxu0 0.0
      %729 = vmatprep.subr.mxu0 0.0
      %730 = vmatpush1.msra.mxu0 0.0
      %731 = vmatprep.subr.mxu0 0.0
      %732 = vmatpush1.msra.mxu0 0.0
      %733 = vmatprep.subr.mxu0 0.0
      %734 = vmatpush1.msra.mxu0 0.0
      %735 = vmatprep.subr.mxu0 0.0
      %736 = vmatpush1.msra.mxu0 0.0
      %737 = vmatprep.subr.mxu0 0.0
      %738 = vmatpush1.msra.mxu0 0.0
      %739 = vmatprep.subr.mxu0 0.0
      %740 = vmatpush1.msra.mxu0 0.0
      %741 = vmatprep.subr.mxu0 0.0
      %742 = vmatpush1.msra.mxu0 0.0
      %743 = vmatprep.subr.mxu0 0.0
      %744 = vmatpush1.msra.mxu0 %v714
      %745 = vmatprep.subr.mxu0 0.0
      %746 = vmatpush1.msra.mxu0 %v713
      %747 = vmatprep.subr.mxu0 0.0
      %748 = vmatpush1.msra.mxu0 %v712
      %749 = vmatprep.subr.mxu0 0.0
      %750 = vmatpush1.msra.mxu0 %v711
      %751 = vmatprep.subr.mxu0 0.0
      %752 = vmatpush2.msra.mxu0 0.0
      %753 = vmatprep.subr.mxu0 0.0
      %754 = vmatpush2.msra.mxu0 0.0
      %755 = vmatprep.subr.mxu0 0.0
      %756 = vmatpush2.msra.mxu0 0.0
      %757 = vmatprep.subr.mxu0 0.0
      %758 = vmatpush2.msra.mxu0 0.0
      %759 = vmatprep.subr.mxu0 0.0
      %760 = vmatpush2.msra.mxu0 0.0
      %761 = vmatprep.subr.mxu0 0.0
      %762 = vmatpush2.msra.mxu0 0.0
      %763 = vmatprep.subr.mxu0 0.0
      %764 = vmatpush2.msra.mxu0 0.0
      %765 = vmatprep.subr.mxu0 0.0
      %766 = vmatpush2.msra.mxu0 0.0
      %767 = vmatprep.subr.mxu0 0.0
      %768 = vmatpush2.msra.mxu0 0.0
      %769 = vmatprep.subr.mxu0 0.0
      %770 = vmatpush2.msra.mxu0 0.0
      %771 = vmatprep.subr.mxu0 0.0
      %772 = vmatpush2.msra.mxu0 0.0
      %773 = vmatprep.subr.mxu0 0.0
      %774 = vmatpush2.msra.mxu0 0.0
      %775 = vmatprep.subr.mxu0 0.0
      %776 = vmatpush2.msra.mxu0 0.0
      %777 = vmatprep.subr.mxu0 0.0
      %778 = vmatpush2.msra.mxu0 0.0
      %779 = vmatprep.subr.mxu0 0.0
      %780 = vmatpush2.msra.mxu0 0.0
      %781 = vmatprep.subr.mxu0 0.0
      %782 = vmatpush2.msra.mxu0 0.0
      %783 = vmatprep.mubr.f32.mxu0 0.0
      %784 = vmatmul.mubr.f32.gmra.mxu0 %v717
      %v785 = vpop.f32.mrf.mxu0
      %v786 = vadd.f32 0.0, %v785
      %v787 = vpop.f32.mrf.mxu0
      %788 = vdwg.mxu0
      %v790 = vrot.slane %v786, 1
      %v792 = vadd.f32 %v786, %v790
      %v793 = vsub.f32 0.0, %v792
      %v794 = vmul.f32 %v793, 1.442695
      %v795 = vpow.pop %v794
      %v796 = vadd.f32 %v795, 1.0
      %v797 = vrcp.pop %v796
      %v798 = vmul.f32 1.0, %v797
      %v799 = vld [vmem:[%s3] sm:$0xff]
      %v800 = vld [vmem:[%s3 + $0x8] sm:$0xff]
      %v801 = vld [vmem:[%s3 + $0x10] sm:$0xff]
      %v802 = vld [vmem:[%s3 + $0x18] sm:$0xff]
      %v803 = vld [vmem:[%s3 + $0x20] sm:$0x7]
      %v804 = vlaneseq
      %v805 = vshrl.u32 %v804, 7
      %v806 = vsub.s32 0, %v805
      %v807 = vrot.slane %v798, %v806
      %v808 = vmul.f32 %v799, %v807
      %v809 = vmul.f32 %v800, %v807
      %v810 = vmul.f32 %v801, %v807
      %v811 = vmul.f32 %v802, %v807
      %v812 = vmul.f32 %v803, %v807
      %813 = vmatprep.subr.mxu0 %v284
      %814 = vmatpush1.msra.mxu0 %v283
      %815 = vmatprep.subr.mxu0 %v282
      %816 = vmatpush1.msra.mxu0 %v281
      %817 = vmatprep.subr.mxu0 %v280
      %818 = vmatpush1.msra.mxu0 %v279
      %819 = vmatprep.subr.mxu0 %v278
      %820 = vmatpush1.msra.mxu0 %v277
      %821 = vmatprep.subr.mxu0 %v276
      %822 = vmatpush1.msra.mxu0 %v275
      %823 = vmatprep.subr.mxu0 %v274
      %824 = vmatpush1.msra.mxu0 %v273
      %825 = vmatprep.subr.mxu0 %v272
      %826 = vmatpush1.msra.mxu0 %v271
      %827 = vmatprep.subr.mxu0 %v270
      %828 = vmatpush1.msra.mxu0 %v269
      %829 = vmatprep.subr.mxu0 %v268
      %830 = vmatpush1.msra.mxu0 %v267
      %831 = vmatprep.subr.mxu0 %v266
      %832 = vmatpush1.msra.mxu0 %v265
      %833 = vmatprep.subr.mxu0 %v264
      %834 = vmatpush1.msra.mxu0 %v263
      %835 = vmatprep.subr.mxu0 %v262
      %836 = vmatpush1.msra.mxu0 %v261
      %837 = vmatprep.subr.mxu0 %v260
      %838 = vmatpush1.msra.mxu0 %v259
      %839 = vmatprep.subr.mxu0 %v258
      %840 = vmatpush1.msra.mxu0 %v257
      %841 = vmatprep.subr.mxu0 %v256
      %842 = vmatpush1.msra.mxu0 %v255
      %843 = vmatprep.subr.mxu0 %v254
      %844 = vmatpush1.msra.mxu0 %v253
      %845 = vmatprep.subr.mxu0 0.0
      %846 = vmatpush2.msra.mxu0 0.0
      %847 = vmatprep.subr.mxu0 0.0
      %848 = vmatpush2.msra.mxu0 0.0
      %849 = vmatprep.subr.mxu0 0.0
      %850 = vmatpush2.msra.mxu0 0.0
      %851 = vmatprep.subr.mxu0 0.0
      %852 = vmatpush2.msra.mxu0 0.0
      %853 = vmatprep.subr.mxu0 0.0
      %854 = vmatpush2.msra.mxu0 0.0
      %855 = vmatprep.subr.mxu0 0.0
      %856 = vmatpush2.msra.mxu0 0.0
      %857 = vmatprep.subr.mxu0 0.0
      %858 = vmatpush2.msra.mxu0 0.0
      %859 = vmatprep.subr.mxu0 0.0
      %860 = vmatpush2.msra.mxu0 0.0
      %861 = vmatprep.subr.mxu0 0.0
      %862 = vmatpush2.msra.mxu0 0.0
      %863 = vmatprep.subr.mxu0 0.0
      %864 = vmatpush2.msra.mxu0 0.0
      %865 = vmatprep.subr.mxu0 0.0
      %866 = vmatpush2.msra.mxu0 0.0
      %867 = vmatprep.subr.mxu0 0.0
      %868 = vmatpush2.msra.mxu0 0.0
      %869 = vmatprep.subr.mxu0 0.0
      %870 = vmatpush2.msra.mxu0 0.0
      %871 = vmatprep.subr.mxu0 0.0
      %872 = vmatpush2.msra.mxu0 0.0
      %873 = vmatprep.subr.mxu0 0.0
      %874 = vmatpush2.msra.mxu0 0.0
      %875 = vmatprep.subr.mxu0 0.0
      %876 = vmatpush2.msra.mxu0 0.0
      %877 = vmatprep.mubr.f32.mxu0 0.0
      %878 = vmatmul.mubr.f32.gmra.mxu0 %v808
      %v879 = vpop.f32.mrf.mxu0
      %v880 = vadd.f32 0.0, %v879
      %v881 = vpop.f32.mrf.mxu0
      %v882 = vadd.f32 0.0, %v881
      %883 = vmatprep.mubr.f32.mxu0 0.0
      %884 = vmatmul.mubr.f32.gmra.mxu0 %v809
      %v885 = vpop.f32.mrf.mxu0
      %v886 = vadd.f32 0.0, %v885
      %v887 = vpop.f32.mrf.mxu0
      %v888 = vadd.f32 0.0, %v887
      %889 = vmatprep.mubr.f32.mxu0 0.0
      %890 = vmatmul.mubr.f32.gmra.mxu0 %v810
      %v891 = vpop.f32.mrf.mxu0
      %v892 = vadd.f32 0.0, %v891
      %v893 = vpop.f32.mrf.mxu0
      %v894 = vadd.f32 0.0, %v893
      %895 = vmatprep.mubr.f32.mxu0 0.0
      %896 = vmatmul.mubr.f32.gmra.mxu0 %v811
      %v897 = vpop.f32.mrf.mxu0
      %v898 = vadd.f32 0.0, %v897
      %v899 = vpop.f32.mrf.mxu0
      %v900 = vadd.f32 0.0, %v899
      %901 = vmatprep.mubr.f32.mxu0 0.0
      %902 = vmatmul.mubr.f32.gmra.mxu0 %v812
      %v903 = vpop.f32.mrf.mxu0
      %v904 = vadd.f32 0.0, %v903
      %v905 = vpop.f32.mrf.mxu0
      %v906 = vadd.f32 0.0, %v905
      %907 = vdwg.mxu0
      %v908 = vld [vmem:[%s4] sm:$0xff]
      %v909 = vld [vmem:[%s4 + $0x8] sm:$0xff]
      %v910 = vld [vmem:[%s4 + $0x10] sm:$0xff]
      %v911 = vld [vmem:[%s4 + $0x18] sm:$0xff]
      %v912 = vld [vmem:[%s4 + $0x20] sm:$0xff]
      %v913 = vld [vmem:[%s4 + $0x28] sm:$0xff]
      %v914 = vld [vmem:[%s4 + $0x30] sm:$0xff]
      %v915 = vld [vmem:[%s4 + $0x38] sm:$0xff]
      %v916 = vld [vmem:[%s4 + $0x40] sm:$0x7]
      %v917 = vld [vmem:[%s4 + $0x48] sm:$0x7]
      %v918 = vmul.f32 %v880, %v908
      %v919 = vmul.f32 %v882, %v909
      %v920 = vmul.f32 %v886, %v910
      %v921 = vmul.f32 %v888, %v911
      %v922 = vmul.f32 %v892, %v912
      %v923 = vmul.f32 %v894, %v913
      %v924 = vmul.f32 %v898, %v914
      %v925 = vmul.f32 %v900, %v915
      %v926 = vmul.f32 %v904, %v916
      %v927 = vmul.f32 %v906, %v917
      %v930 = vrot.slane %v918, 1
      %v931 = vrot.slane %v919, 1
      %934 = vrot.lane.b32.xlu0 %v930, 17
      %v935 = vpop.permute.xlu0 %934
      %936 = vrot.lane.b32.xlu0 %v931, 17
      %v937 = vpop.permute.xlu0 %936
      %vm938 = vcmp.lt.s32.totalorder %v415, 17
      %v939 = vsel %vm938, %v935, %v937
      %v940 = vsel %vm938, %v937, %v935
      %v941 = vrot.slane %v918, 2
      %v942 = vrot.slane %v919, 2
      %945 = vrot.lane.b32.xlu0 %v941, 16
      %v946 = vpop.permute.xlu0 %945
      %947 = vrot.lane.b32.xlu0 %v942, 16
      %v948 = vpop.permute.xlu0 %947
      %vm949 = vcmp.lt.s32.totalorder %v415, 16
      %v950 = vsel %vm949, %v946, %v948
      %v951 = vsel %vm949, %v948, %v946
      %v952 = vrot.slane %v918, 3
      %v953 = vrot.slane %v919, 3
      %956 = vrot.lane.b32.xlu0 %v952, 15
      %v957 = vpop.permute.xlu0 %956
      %958 = vrot.lane.b32.xlu0 %v953, 15
      %v959 = vpop.permute.xlu0 %958
      %vm960 = vcmp.lt.s32.totalorder %v415, 15
      %v961 = vsel %vm960, %v957, %v959
      %v962 = vsel %vm960, %v959, %v957
      %v963 = vrot.slane %v918, 4
      %v964 = vrot.slane %v919, 4
      %967 = vrot.lane.b32.xlu0 %v963, 1
      %v968 = vpop.permute.xlu0 %967
      %969 = vrot.lane.b32.xlu0 %v964, 1
      %v970 = vpop.permute.xlu0 %969
      %vm971 = vcmp.lt.s32.totalorder %v415, 1
      %v972 = vsel %vm971, %v968, %v970
      %v973 = vsel %vm971, %v970, %v968
      %v974 = vrot.slane %v918, 6
      %v975 = vrot.slane %v919, 6
      %978 = vrot.lane.b32.xlu0 %v974, 127
      %v979 = vpop.permute.xlu0 %978
      %980 = vrot.lane.b32.xlu0 %v975, 127
      %v981 = vpop.permute.xlu0 %980
      %vm982 = vcmp.lt.s32.totalorder %v415, 127
      %v983 = vsel %vm982, %v979, %v981
      %v984 = vsel %vm982, %v981, %v979
      %v985 = vrot.slane %v918, 7
      %v986 = vrot.slane %v919, 7
      %989 = vrot.lane.b32.xlu0 %v985, 113
      %v990 = vpop.permute.xlu0 %989
      %991 = vrot.lane.b32.xlu0 %v986, 113
      %v992 = vpop.permute.xlu0 %991
      %vm993 = vcmp.lt.s32.totalorder %v415, 113
      %v994 = vsel %vm993, %v990, %v992
      %v995 = vsel %vm993, %v992, %v990
      %996 = vrot.lane.b32.xlu0 %v920, 112
      %v997 = vpop.permute.xlu0 %996
      %998 = vrot.lane.b32.xlu0 %v921, 112
      %v999 = vpop.permute.xlu0 %998
      %vm1000 = vcmp.lt.s32.totalorder %v415, 112
      %v1001 = vsel %vm1000, %v997, %v999
      %v1002 = vsel %vm1000, %v999, %v997
      %v1005 = vrot.slane %v920, 1
      %v1006 = vrot.slane %v921, 1
      %1009 = vrot.lane.b32.xlu0 %v1005, 111
      %v1010 = vpop.permute.xlu0 %1009
      %1011 = vrot.lane.b32.xlu0 %v1006, 111
      %v1012 = vpop.permute.xlu0 %1011
      %vm1013 = vcmp.lt.s32.totalorder %v415, 111
      %v1014 = vsel %vm1013, %v1010, %v1012
      %v1015 = vsel %vm1013, %v1012, %v1010
      %v1016 = vrot.slane %v920, 2
      %v1017 = vrot.slane %v921, 2
      %1020 = vrot.lane.b32.xlu0 %v1016, 34
      %v1021 = vpop.permute.xlu0 %1020
      %1022 = vrot.lane.b32.xlu0 %v1017, 34
      %v1023 = vpop.permute.xlu0 %1022
      %vm1024 = vcmp.lt.s32.totalorder %v415, 34
      %v1025 = vsel %vm1024, %v1021, %v1023
      %v1026 = vsel %vm1024, %v1023, %v1021
      %v1027 = vrot.slane %v920, 3
      %v1028 = vrot.slane %v921, 3
      %1031 = vrot.lane.b32.xlu0 %v1027, 33
      %v1032 = vpop.permute.xlu0 %1031
      %1033 = vrot.lane.b32.xlu0 %v1028, 33
      %v1034 = vpop.permute.xlu0 %1033
      %vm1035 = vcmp.lt.s32.totalorder %v415, 33
      %v1036 = vsel %vm1035, %v1032, %v1034
      %v1037 = vsel %vm1035, %v1034, %v1032
      %v1038 = vrot.slane %v920, 4
      %v1039 = vrot.slane %v921, 4
      %1042 = vrot.lane.b32.xlu0 %v1038, 32
      %v1043 = vpop.permute.xlu0 %1042
      %1044 = vrot.lane.b32.xlu0 %v1039, 32
      %v1045 = vpop.permute.xlu0 %1044
      %vm1046 = vcmp.lt.s32.totalorder %v415, 32
      %v1047 = vsel %vm1046, %v1043, %v1045
      %v1048 = vsel %vm1046, %v1045, %v1043
      %v1049 = vrot.slane %v920, 5
      %v1050 = vrot.slane %v921, 5
      %1053 = vrot.lane.b32.xlu0 %v1049, 31
      %v1054 = vpop.permute.xlu0 %1053
      %1055 = vrot.lane.b32.xlu0 %v1050, 31
      %v1056 = vpop.permute.xlu0 %1055
      %vm1057 = vcmp.lt.s32.totalorder %v415, 31
      %v1058 = vsel %vm1057, %v1054, %v1056
      %v1059 = vsel %vm1057, %v1056, %v1054
      %v1060 = vrot.slane %v920, 6
      %v1061 = vrot.slane %v921, 6
      %1064 = vrot.lane.b32.xlu0 %v1060, 30
      %v1065 = vpop.permute.xlu0 %1064
      %1066 = vrot.lane.b32.xlu0 %v1061, 30
      %v1067 = vpop.permute.xlu0 %1066
      %vm1068 = vcmp.lt.s32.totalorder %v415, 30
      %v1069 = vsel %vm1068, %v1065, %v1067
      %v1070 = vsel %vm1068, %v1067, %v1065
      %v1071 = vrot.slane %v920, 7
      %v1072 = vrot.slane %v921, 7
      %1075 = vrot.lane.b32.xlu0 %v1071, 18
      %v1076 = vpop.permute.xlu0 %1075
      %1077 = vrot.lane.b32.xlu0 %v1072, 18
      %v1078 = vpop.permute.xlu0 %1077
      %vm1079 = vcmp.lt.s32.totalorder %v415, 18
      %v1080 = vsel %vm1079, %v1076, %v1078
      %v1081 = vsel %vm1079, %v1078, %v1076
      %1082 = vrot.lane.b32.xlu0 %v922, 17
      %v1083 = vpop.permute.xlu0 %1082
      %1084 = vrot.lane.b32.xlu0 %v923, 17
      %v1085 = vpop.permute.xlu0 %1084
      %v1086 = vsel %vm938, %v1083, %v1085
      %v1087 = vsel %vm938, %v1085, %v1083
      %v1090 = vrot.slane %v922, 1
      %v1091 = vrot.slane %v923, 1
      %1094 = vrot.lane.b32.xlu0 %v1090, 16
      %v1095 = vpop.permute.xlu0 %1094
      %1096 = vrot.lane.b32.xlu0 %v1091, 16
      %v1097 = vpop.permute.xlu0 %1096
      %v1098 = vsel %vm949, %v1095, %v1097
      %v1099 = vsel %vm949, %v1097, %v1095
      %v1100 = vrot.slane %v922, 2
      %v1101 = vrot.slane %v923, 2
      %1104 = vrot.lane.b32.xlu0 %v1100, 15
      %v1105 = vpop.permute.xlu0 %1104
      %1106 = vrot.lane.b32.xlu0 %v1101, 15
      %v1107 = vpop.permute.xlu0 %1106
      %v1108 = vsel %vm960, %v1105, %v1107
      %v1109 = vsel %vm960, %v1107, %v1105
      %v1110 = vrot.slane %v922, 3
      %v1111 = vrot.slane %v923, 3
      %1114 = vrot.lane.b32.xlu0 %v1110, 14
      %v1115 = vpop.permute.xlu0 %1114
      %1116 = vrot.lane.b32.xlu0 %v1111, 14
      %v1117 = vpop.permute.xlu0 %1116
      %vm1118 = vcmp.lt.s32.totalorder %v415, 14
      %v1119 = vsel %vm1118, %v1115, %v1117
      %v1120 = vsel %vm1118, %v1117, %v1115
      %v1121 = vrot.slane %v922, 4
      %v1122 = vrot.slane %v923, 4
      %1125 = vrot.lane.b32.xlu0 %v1121, 2
      %v1126 = vpop.permute.xlu0 %1125
      %1127 = vrot.lane.b32.xlu0 %v1122, 2
      %v1128 = vpop.permute.xlu0 %1127
      %vm1129 = vcmp.lt.s32.totalorder %v415, 2
      %v1130 = vsel %vm1129, %v1126, %v1128
      %v1131 = vsel %vm1129, %v1128, %v1126
      %v1132 = vrot.slane %v922, 5
      %v1133 = vrot.slane %v923, 5
      %1136 = vrot.lane.b32.xlu0 %v1132, 1
      %v1137 = vpop.permute.xlu0 %1136
      %1138 = vrot.lane.b32.xlu0 %v1133, 1
      %v1139 = vpop.permute.xlu0 %1138
      %v1140 = vsel %vm971, %v1137, %v1139
      %v1141 = vsel %vm971, %v1139, %v1137
      %v1142 = vrot.slane %v922, 7
      %v1143 = vrot.slane %v923, 7
      %1146 = vrot.lane.b32.xlu0 %v1142, 127
      %v1147 = vpop.permute.xlu0 %1146
      %1148 = vrot.lane.b32.xlu0 %v1143, 127
      %v1149 = vpop.permute.xlu0 %1148
      %v1150 = vsel %vm982, %v1147, %v1149
      %v1151 = vsel %vm982, %v1149, %v1147
      %1152 = vrot.lane.b32.xlu0 %v924, 126
      %v1153 = vpop.permute.xlu0 %1152
      %1154 = vrot.lane.b32.xlu0 %v925, 126
      %v1155 = vpop.permute.xlu0 %1154
      %vm1156 = vcmp.lt.s32.totalorder %v415, 126
      %v1157 = vsel %vm1156, %v1153, %v1155
      %v1158 = vsel %vm1156, %v1155, %v1153
      %v1161 = vrot.slane %v924, 1
      %v1162 = vrot.slane %v925, 1
      %1165 = vrot.lane.b32.xlu0 %v1161, 114
      %v1166 = vpop.permute.xlu0 %1165
      %1167 = vrot.lane.b32.xlu0 %v1162, 114
      %v1168 = vpop.permute.xlu0 %1167
      %vm1169 = vcmp.lt.s32.totalorder %v415, 114
      %v1170 = vsel %vm1169, %v1166, %v1168
      %v1171 = vsel %vm1169, %v1168, %v1166
      %v1172 = vrot.slane %v924, 2
      %v1173 = vrot.slane %v925, 2
      %1176 = vrot.lane.b32.xlu0 %v1172, 113
      %v1177 = vpop.permute.xlu0 %1176
      %1178 = vrot.lane.b32.xlu0 %v1173, 113
      %v1179 = vpop.permute.xlu0 %1178
      %v1180 = vsel %vm993, %v1177, %v1179
      %v1181 = vsel %vm993, %v1179, %v1177
      %v1182 = vrot.slane %v924, 3
      %v1183 = vrot.slane %v925, 3
      %1186 = vrot.lane.b32.xlu0 %v1182, 112
      %v1187 = vpop.permute.xlu0 %1186
      %1188 = vrot.lane.b32.xlu0 %v1183, 112
      %v1189 = vpop.permute.xlu0 %1188
      %v1190 = vsel %vm1000, %v1187, %v1189
      %v1191 = vsel %vm1000, %v1189, %v1187
      %v1192 = vrot.slane %v924, 4
      %v1193 = vrot.slane %v925, 4
      %1196 = vrot.lane.b32.xlu0 %v1192, 111
      %v1197 = vpop.permute.xlu0 %1196
      %1198 = vrot.lane.b32.xlu0 %v1193, 111
      %v1199 = vpop.permute.xlu0 %1198
      %v1200 = vsel %vm1013, %v1197, %v1199
      %v1201 = vsel %vm1013, %v1199, %v1197
      %v1202 = vrot.slane %v924, 5
      %v1203 = vrot.slane %v925, 5
      %1206 = vrot.lane.b32.xlu0 %v1202, 110
      %v1207 = vpop.permute.xlu0 %1206
      %1208 = vrot.lane.b32.xlu0 %v1203, 110
      %v1209 = vpop.permute.xlu0 %1208
      %vm1210 = vcmp.lt.s32.totalorder %v415, 110
      %v1211 = vsel %vm1210, %v1207, %v1209
      %v1212 = vsel %vm1210, %v1209, %v1207
      %v1213 = vrot.slane %v924, 6
      %v1214 = vrot.slane %v925, 6
      %1217 = vrot.lane.b32.xlu0 %v1213, 98
      %v1218 = vpop.permute.xlu0 %1217
      %1219 = vrot.lane.b32.xlu0 %v1214, 98
      %v1220 = vpop.permute.xlu0 %1219
      %vm1221 = vcmp.lt.s32.totalorder %v415, 98
      %v1222 = vsel %vm1221, %v1218, %v1220
      %v1223 = vsel %vm1221, %v1220, %v1218
      %v1224 = vrot.slane %v924, 7
      %v1225 = vrot.slane %v925, 7
      %1228 = vrot.lane.b32.xlu0 %v1224, 97
      %v1229 = vpop.permute.xlu0 %1228
      %1230 = vrot.lane.b32.xlu0 %v1225, 97
      %v1231 = vpop.permute.xlu0 %1230
      %vm1232 = vcmp.lt.s32.totalorder %v415, 97
      %v1233 = vsel %vm1232, %v1229, %v1231
      %v1234 = vsel %vm1232, %v1231, %v1229
      %1235 = vrot.lane.b32.xlu0 %v926, 96
      %v1236 = vpop.permute.xlu0 %1235
      %1237 = vrot.lane.b32.xlu0 %v927, 96
      %v1238 = vpop.permute.xlu0 %1237
      %vm1239 = vcmp.lt.s32.totalorder %v415, 96
      %v1240 = vsel %vm1239, %v1236, %v1238
      %v1241 = vsel %vm1239, %v1238, %v1236
      %v1244 = vrot.slane %v926, 1
      %v1245 = vrot.slane %v927, 1
      %1248 = vrot.lane.b32.xlu0 %v1244, 95
      %v1249 = vpop.permute.xlu0 %1248
      %1250 = vrot.lane.b32.xlu0 %v1245, 95
      %v1251 = vpop.permute.xlu0 %1250
      %vm1252 = vcmp.lt.s32.totalorder %v415, 95
      %v1253 = vsel %vm1252, %v1249, %v1251
      %v1254 = vsel %vm1252, %v1251, %v1249
      %v1255 = vrot.slane %v926, 2
      %v1256 = vrot.slane %v927, 2
      %1259 = vrot.lane.b32.xlu0 %v1255, 94
      %v1260 = vpop.permute.xlu0 %1259
      %1261 = vrot.lane.b32.xlu0 %v1256, 94
      %v1262 = vpop.permute.xlu0 %1261
      %vm1263 = vcmp.lt.s32.totalorder %v415, 94
      %v1264 = vsel %vm1263, %v1260, %v1262
      %v1265 = vsel %vm1263, %v1262, %v1260
      %v1266 = vadd.f32 %v918, %v940
      %v1267 = vadd.f32 %v919, %v939
      %v1268 = vadd.f32 %v951, %v962
      %v1269 = vadd.f32 %v950, %v961
      %v1270 = vrot.slane %v918, 5
      %v1271 = vrot.slane %v919, 5
      %v1274 = vadd.f32 %v973, %v1270
      %v1275 = vadd.f32 %v972, %v1271
      %v1276 = vadd.f32 %v983, %v994
      %v1277 = vadd.f32 %v984, %v995
      %v1278 = vadd.f32 %v1001, %v1014
      %v1279 = vadd.f32 %v1002, %v1015
      %v1280 = vadd.f32 %v1026, %v1037
      %v1281 = vadd.f32 %v1025, %v1036
      %v1282 = vadd.f32 %v1048, %v1059
      %v1283 = vadd.f32 %v1047, %v1058
      %v1284 = vadd.f32 %v1070, %v1081
      %v1285 = vadd.f32 %v1069, %v1080
      %v1286 = vadd.f32 %v1087, %v1099
      %v1287 = vadd.f32 %v1086, %v1098
      %v1288 = vadd.f32 %v1109, %v1120
      %v1289 = vadd.f32 %v1108, %v1119
      %v1290 = vadd.f32 %v1131, %v1141
      %v1291 = vadd.f32 %v1130, %v1140
      %v1294 = vrot.slane %v1150, 2
      %v1295 = vrot.slane %v1151, 2
      %v1298 = vadd.f32 %v922, %v1294
      %v1299 = vadd.f32 %v923, %v1295
      %v1300 = vadd.f32 %v1157, %v1170
      %v1301 = vadd.f32 %v1158, %v1171
      %v1302 = vadd.f32 %v1180, %v1190
      %v1303 = vadd.f32 %v1181, %v1191
      %v1304 = vadd.f32 %v1200, %v1211
      %v1305 = vadd.f32 %v1201, %v1212
      %v1306 = vadd.f32 %v1222, %v1233
      %v1307 = vadd.f32 %v1223, %v1234
      %v1308 = vadd.f32 %v1240, %v1253
      %v1309 = vadd.f32 %v1241, %v1254
      %v1310 = vadd.f32 %v1266, %v1268
      %v1311 = vadd.f32 %v1267, %v1269
      %v1312 = vadd.f32 %v1274, %v1276
      %v1313 = vadd.f32 %v1275, %v1277
      %v1314 = vadd.f32 %v1278, %v1280
      %v1315 = vadd.f32 %v1279, %v1281
      %v1316 = vadd.f32 %v1282, %v1284
      %v1317 = vadd.f32 %v1283, %v1285
      %v1318 = vadd.f32 %v1286, %v1288
      %v1319 = vadd.f32 %v1287, %v1289
      %v1322 = vrot.slane %v1298, 6
      %v1323 = vrot.slane %v1299, 6
      %v1326 = vadd.f32 %v1290, %v1322
      %v1327 = vadd.f32 %v1291, %v1323
      %v1328 = vadd.f32 %v1300, %v1302
      %v1329 = vadd.f32 %v1301, %v1303
      %v1330 = vadd.f32 %v1304, %v1306
      %v1331 = vadd.f32 %v1305, %v1307
      %v1332 = vadd.f32 %v1308, %v1264
      %v1333 = vadd.f32 %v1309, %v1265
      %v1334 = vadd.f32 %v1310, %v1312
      %v1335 = vadd.f32 %v1311, %v1313
      %v1336 = vadd.f32 %v1314, %v1316
      %v1337 = vadd.f32 %v1315, %v1317
      %v1338 = vadd.f32 %v1318, %v1326
      %v1339 = vadd.f32 %v1319, %v1327
      %v1340 = vadd.f32 %v1328, %v1330
      %v1341 = vadd.f32 %v1329, %v1331
      %v1342 = vadd.f32 %v1334, %v1336
      %v1343 = vadd.f32 %v1335, %v1337
      %v1344 = vadd.f32 %v1338, %v1340
      %v1345 = vadd.f32 %v1339, %v1341
      %v1346 = vadd.f32 %v1342, %v1344
      %v1347 = vadd.f32 %v1343, %v1345
      %v1348 = vadd.f32 %v1346, %v1332
      %v1349 = vadd.f32 %v1347, %v1333
      %s1350 = sld [smem:[#allocation2]]
      %v1351 = vstv %s1350
      %v1352 = vadd.f32 %v1348, %v1351
      %v1353 = vadd.f32 %v1349, %v1351
      %v1354 = vsub.f32 0.0, %v1352
      %v1355 = vsub.f32 0.0, %v1353
      %v1356 = vmul.f32 %v1354, 1.442695
      %v1357 = vpow.pop %v1356
      %v1358 = vmul.f32 %v1355, 1.442695
      %v1359 = vpow.pop %v1358
      %v1360 = vadd.f32 %v1357, 1.0
      %v1361 = vadd.f32 %v1359, 1.0
      %v1362 = vrcp.pop %v1360
      %v1363 = vmul.f32 1.0, %v1362
      %v1364 = vrcp.pop %v1361
      %v1365 = vmul.f32 1.0, %v1364
      %1367 = vbcast.lane.b32.xlu0 %v807, 256
      %v1368 = vpop.permute.xlu0 %1367
      %s1370 = sor.u32 256, 8
      %1371 = vbcast.lane.b32.xlu0 %v807, %s1370
      %v1372 = vpop.permute.xlu0 %1371
      %s1374 = sor.u32 256, 16
      %1375 = vbcast.lane.b32.xlu0 %v807, %s1374
      %v1376 = vpop.permute.xlu0 %1375
      %s1378 = sor.u32 256, 24
      %1379 = vbcast.lane.b32.xlu0 %v807, %s1378
      %v1380 = vpop.permute.xlu0 %1379
      %s1382 = sor.u32 256, 32
      %1383 = vbcast.lane.b32.xlu0 %v807, %s1382
      %v1384 = vpop.permute.xlu0 %1383
      %s1386 = sor.u32 256, 40
      %1387 = vbcast.lane.b32.xlu0 %v807, %s1386
      %v1388 = vpop.permute.xlu0 %1387
      %s1390 = sor.u32 256, 48
      %1391 = vbcast.lane.b32.xlu0 %v807, %s1390
      %v1392 = vpop.permute.xlu0 %1391
      %s1394 = sor.u32 256, 56
      %1395 = vbcast.lane.b32.xlu0 %v807, %s1394
      %v1396 = vpop.permute.xlu0 %1395
      %s1398 = sor.u32 256, 64
      %1399 = vbcast.lane.b32.xlu0 %v807, %s1398
      %v1400 = vpop.permute.xlu0 %1399
      %s1402 = sor.u32 256, 72
      %1403 = vbcast.lane.b32.xlu0 %v807, %s1402
      %v1404 = vpop.permute.xlu0 %1403
      %s1406 = sor.u32 256, 80
      %1407 = vbcast.lane.b32.xlu0 %v807, %s1406
      %v1408 = vpop.permute.xlu0 %1407
      %s1410 = sor.u32 256, 88
      %1411 = vbcast.lane.b32.xlu0 %v807, %s1410
      %v1412 = vpop.permute.xlu0 %1411
      %s1414 = sor.u32 256, 96
      %1415 = vbcast.lane.b32.xlu0 %v807, %s1414
      %v1416 = vpop.permute.xlu0 %1415
      %s1418 = sor.u32 256, 104
      %1419 = vbcast.lane.b32.xlu0 %v807, %s1418
      %v1420 = vpop.permute.xlu0 %1419
      %s1422 = sor.u32 256, 112
      %1423 = vbcast.lane.b32.xlu0 %v807, %s1422
      %v1424 = vpop.permute.xlu0 %1423
      %s1426 = sor.u32 256, 120
      %1427 = vbcast.lane.b32.xlu0 %v807, %s1426
      %v1428 = vpop.permute.xlu0 %1427
      %v1429 = vmul.f32 %v253, %v1368
      %v1430 = vmul.f32 %v254, %v1368
      %v1431 = vmul.f32 %v255, %v1372
      %v1432 = vmul.f32 %v256, %v1372
      %v1433 = vmul.f32 %v257, %v1376
      %v1434 = vmul.f32 %v258, %v1376
      %v1435 = vmul.f32 %v259, %v1380
      %v1436 = vmul.f32 %v260, %v1380
      %v1437 = vmul.f32 %v261, %v1384
      %v1438 = vmul.f32 %v262, %v1384
      %v1439 = vmul.f32 %v263, %v1388
      %v1440 = vmul.f32 %v264, %v1388
      %v1441 = vmul.f32 %v265, %v1392
      %v1442 = vmul.f32 %v266, %v1392
      %v1443 = vmul.f32 %v267, %v1396
      %v1444 = vmul.f32 %v268, %v1396
      %v1445 = vmul.f32 %v269, %v1400
      %v1446 = vmul.f32 %v270, %v1400
      %v1447 = vmul.f32 %v271, %v1404
      %v1448 = vmul.f32 %v272, %v1404
      %v1449 = vmul.f32 %v273, %v1408
      %v1450 = vmul.f32 %v274, %v1408
      %v1451 = vmul.f32 %v275, %v1412
      %v1452 = vmul.f32 %v276, %v1412
      %v1453 = vmul.f32 %v277, %v1416
      %v1454 = vmul.f32 %v278, %v1416
      %v1455 = vmul.f32 %v279, %v1420
      %v1456 = vmul.f32 %v280, %v1420
      %v1457 = vmul.f32 %v281, %v1424
      %v1458 = vmul.f32 %v282, %v1424
      %v1459 = vmul.f32 %v283, %v1428
      %v1460 = vmul.f32 %v284, %v1428
      %v1461 = vlaneseq
      %v1462 = vshrl.u32 %v1461, 7
      %v1463 = vsub.s32 0, %v1462
      %v1464 = vrot.slane %v1363, %v1463
      %v1465 = vlaneseq
      %v1466 = vshrl.u32 %v1465, 7
      %v1467 = vsub.s32 0, %v1466
      %v1468 = vrot.slane %v1365, %v1467
      %v1469 = vmul.f32 %v1429, %v1464
      %v1470 = vmul.f32 %v1430, %v1468
      %v1471 = vmul.f32 %v1431, %v1464
      %v1472 = vmul.f32 %v1432, %v1468
      %v1473 = vmul.f32 %v1433, %v1464
      %v1474 = vmul.f32 %v1434, %v1468
      %v1475 = vmul.f32 %v1435, %v1464
      %v1476 = vmul.f32 %v1436, %v1468
      %v1477 = vmul.f32 %v1437, %v1464
      %v1478 = vmul.f32 %v1438, %v1468
      %v1479 = vmul.f32 %v1439, %v1464
      %v1480 = vmul.f32 %v1440, %v1468
      %v1481 = vmul.f32 %v1441, %v1464
      %v1482 = vmul.f32 %v1442, %v1468
      %v1483 = vmul.f32 %v1443, %v1464
      %v1484 = vmul.f32 %v1444, %v1468
      %v1485 = vmul.f32 %v1445, %v1464
      %v1486 = vmul.f32 %v1446, %v1468
      %v1487 = vmul.f32 %v1447, %v1464
      %v1488 = vmul.f32 %v1448, %v1468
      %v1489 = vmul.f32 %v1449, %v1464
      %v1490 = vmul.f32 %v1450, %v1468
      %v1491 = vmul.f32 %v1451, %v1464
      %v1492 = vmul.f32 %v1452, %v1468
      %v1493 = vmul.f32 %v1453, %v1464
      %v1494 = vmul.f32 %v1454, %v1468
      %v1495 = vmul.f32 %v1455, %v1464
      %v1496 = vmul.f32 %v1456, %v1468
      %v1497 = vmul.f32 %v1457, %v1464
      %v1498 = vmul.f32 %v1458, %v1468
      %v1499 = vmul.f32 %v1459, %v1464
      %v1500 = vmul.f32 %v1460, %v1468
      %1501 = vst [vmem:[%s252] sm:$0xff] %v1469
      %1502 = vst [vmem:[%s252 + $0x8] sm:$0xff] %v1470
      %1503 = vst [vmem:[%s252 + $0x10] sm:$0xff] %v1471
      %1504 = vst [vmem:[%s252 + $0x18] sm:$0xff] %v1472
      %1505 = vst [vmem:[%s252 + $0x20] sm:$0xff] %v1473
      %1506 = vst [vmem:[%s252 + $0x28] sm:$0xff] %v1474
      %1507 = vst [vmem:[%s252 + $0x30] sm:$0xff] %v1475
      %1508 = vst [vmem:[%s252 + $0x38] sm:$0xff] %v1476
      %1509 = vst [vmem:[%s252 + $0x40] sm:$0xff] %v1477
      %1510 = vst [vmem:[%s252 + $0x48] sm:$0xff] %v1478
      %1511 = vst [vmem:[%s252 + $0x50] sm:$0xff] %v1479
      %1512 = vst [vmem:[%s252 + $0x58] sm:$0xff] %v1480
      %1513 = vst [vmem:[%s252 + $0x60] sm:$0xff] %v1481
      %1514 = vst [vmem:[%s252 + $0x68] sm:$0xff] %v1482
      %1515 = vst [vmem:[%s252 + $0x70] sm:$0xff] %v1483
      %1516 = vst [vmem:[%s252 + $0x78] sm:$0xff] %v1484
      %1517 = vst [vmem:[%s252 + $0x80] sm:$0xff] %v1485
      %1518 = vst [vmem:[%s252 + $0x88] sm:$0xff] %v1486
      %1519 = vst [vmem:[%s252 + $0x90] sm:$0xff] %v1487
      %1520 = vst [vmem:[%s252 + $0x98] sm:$0xff] %v1488
      %1521 = vst [vmem:[%s252 + $0xa0] sm:$0xff] %v1489
      %1522 = vst [vmem:[%s252 + $0xa8] sm:$0xff] %v1490
      %1523 = vst [vmem:[%s252 + $0xb0] sm:$0xff] %v1491
      %1524 = vst [vmem:[%s252 + $0xb8] sm:$0xff] %v1492
      %1525 = vst [vmem:[%s252 + $0xc0] sm:$0xff] %v1493
      %1526 = vst [vmem:[%s252 + $0xc8] sm:$0xff] %v1494
      %1527 = vst [vmem:[%s252 + $0xd0] sm:$0xff] %v1495
      %1528 = vst [vmem:[%s252 + $0xd8] sm:$0xff] %v1496
      %1529 = vst [vmem:[%s252 + $0xe0] sm:$0xff] %v1497
      %1530 = vst [vmem:[%s252 + $0xe8] sm:$0xff] %v1498
      %1531 = vst [vmem:[%s252 + $0xf0] sm:$0xff] %v1499
      %1532 = vst [vmem:[%s252 + $0xf8] sm:$0xff] %v1500
      %p1533 = scmp.lt.s32.totalorder %s18, 1
      %s1534 = scalar_select %p1533, %s18, 1
      %s1535 = smul.addr %s1534, 32
      %s1536 = smul.addr %s1535, 8
      %s1537 = scalar_lea.vmem %s6, %s1536
      // Predicated region
      $region45: #{cbam.1} parent=43 // pred_check
        %p1538 = pneg %p167
      $region46: #{cbam.1} parent=43 // pred_check_branch
        %1540 = sbr.rel (%p1538) target = $region48
      $region47: #{cbam.1} parent=43 // pred_region
        _
      $region48: #{cbam.1} parent=43 // pred_fallthru
        _
    $region44: #{cbam.1} parent=5 // pred_fallthru
      _
    %p1541 = scmp.le.s32.totalorder 2, %s13
    // Predicated region
    $region49: #{cbam.1} parent=5 // pred_check
      %p1542 = pneg %p1541
    $region50: #{cbam.1} parent=5 // pred_check_branch
      %1544 = sbr.rel (%p1542) target = $region52
    $region51: #{cbam.1} parent=5 // pred_region
      %s1545 = ssub.s32 %s13, 2
      // Predicated region
      $region53: #{cbam.1} parent=51 // pred_check
        %p1546 = pneg %p173
      $region54: #{cbam.1} parent=51 // pred_check_branch
        %1548 = sbr.rel (%p1546) target = $region56
      $region55: #{cbam.1} parent=51 // pred_region
        %p1549 = scmp.lt.s32.totalorder %s19, 1
        %s1550 = scalar_select %p1549, %s19, 1
        %s1551 = smul.addr %s1550, 32
        %s1552 = smul.addr %s1551, 8
        %s1553 = scalar_lea.vmem %s6, %s1552
      $region56: #{cbam.1} parent=51 // pred_fallthru
        _
    $region52: #{cbam.1} parent=5 // pred_fallthru
      _
  $region6: #{cbam.1} parent=0 // loop_footer
    %s17 = sadd.s32 1, %s13
  $region7: #{cbam.1} parent=0 // loop_footer_branch
    %12 = sbr.rel target = $region3
  $region8: #{cbam.1} parent=0 // loop_exit
    _

</llo_original>
